<compile_context>
chip_gen: v5e
topology: v5e:2x2
jax: 0.10.0
libtpu: 0.0.40
codegen_flags: <defaults>
</compile_context>

<pallas_src>
import jax
import jax.numpy as jnp
from jax.experimental import pallas as pl
from jax.experimental.pallas import tpu as pltpu


def _drn_kernel(x_ref, dw_ref, aw_ref, fcwd_ref, fcwc_ref, clw_ref, fc2w_ref, b_ref,
                out_ref):
    f32 = jnp.float32
    bf16 = jnp.bfloat16
    relu = lambda t: jnp.maximum(t, 0.0)

    drug_in, drug_emb = dw_ref.shape
    cell_dim = aw_ref.shape[1]
    h0 = fcwd_ref.shape[1]
    h1 = clw_ref.shape[1]
    out_w = fc2w_ref.shape[1]

    # static, 128-aligned offsets into the packed bias vector
    o_db = 0
    o_ab = o_db + drug_emb
    o_fcb = o_ab + cell_dim
    o_clb = o_fcb + h0
    o_f2b = o_clb + h1

    x = x_ref[...]                      # [tb, drug_in + cell_dim] f32
    drug_x = x[:, :drug_in]
    cell_x = x[:, drug_in:]

    # --- drug_embed_net: Linear + ReLU (bf16 matmul, f32 accumulate) ---
    drug_e = relu(
        jnp.dot(drug_x.astype(bf16), dw_ref[...], preferred_element_type=f32)
        + b_ref[:, o_db:o_db + drug_emb])

    # --- attention_net: Linear + Sigmoid over the drug embedding ---
    z = (jnp.dot(drug_e.astype(bf16), aw_ref[...], preferred_element_type=f32)
         + b_ref[:, o_ab:o_ab + cell_dim])
    c_weights = 1.0 / (1.0 + jnp.exp(-z))      # EUP exp + VPU

    weighted_cell = c_weights * cell_x

    # --- fc + ReLU; concat(drug_e, weighted_cell) folded into two matmuls ---
    x1 = relu(
        jnp.dot(drug_e.astype(bf16), fcwd_ref[...], preferred_element_type=f32)
        + jnp.dot(weighted_cell.astype(bf16), fcwc_ref[...], preferred_element_type=f32)
        + b_ref[:, o_fcb:o_fcb + h0])

    # --- classifier[0]: Linear with eval-BatchNorm folded into W/b, then ReLU ---
    # Dropout is identity in eval mode.
    h = relu(
        jnp.dot(x1.astype(bf16), clw_ref[...], preferred_element_type=f32)
        + b_ref[:, o_clb:o_clb + h1])

    # --- fc2 -> 1 output, zero-padded to 128 lanes for a dense store (col 0 real) ---
    out_ref[...] = (
        jnp.dot(h.astype(bf16), fc2w_ref[...], preferred_element_type=f32)
        + b_ref[:, o_f2b:o_f2b + out_w])


def drug_response_net(drug_x, cell_x, params, *, tb=128, bn_eps=1e-5):
    """Fused forward pass.  Params are prepared (BN fold, splits, bf16 cast) host-side."""
    f32 = jnp.float32
    bf16 = jnp.bfloat16

    B, drug_in = drug_x.shape
    cell_dim = cell_x.shape[1]
    drug_emb = params["dw"].shape[1]
    h0 = params["fcw"].shape[1]
    h1 = params["clw"].shape[1]
    out_pad = 128

    # ---- host-side parameter preparation ----
    scale = params["bng"] * jax.lax.rsqrt(params["bnv"] + bn_eps)        # [1, h1]
    clw_f = (params["clw"] * scale).astype(bf16)                          # BN folded
    clb_f = (params["clb"] - params["bnm"]) * scale + params["bnb"]
    fcw_d = params["fcw"][:drug_emb].astype(bf16)                         # concat split
    fcw_c = params["fcw"][drug_emb:].astype(bf16)
    fc2w_p = jnp.zeros((h1, out_pad), f32).at[:, :1].set(params["fc2w"]).astype(bf16)
    fc2b_p = jnp.zeros((1, out_pad), f32).at[:, :1].set(params["fc2b"])
    dw = params["dw"].astype(bf16)
    aw = params["aw"].astype(bf16)
    bias_pack = jnp.concatenate(
        [params["db"], params["ab"], params["fcb"], clb_f, fc2b_p], axis=1).astype(f32)

    # ---- packed, batch-padded input ----
    total_in = drug_in + cell_dim
    x_in = jnp.concatenate([drug_x, cell_x], axis=1).astype(f32)
    n_blocks = pl.cdiv(B, tb)
    b_pad = n_blocks * tb
    if b_pad != B:
        x_in = jnp.pad(x_in, ((0, b_pad - B), (0, 0)))

    ordered = [dw, aw, fcw_d, fcw_c, clw_f, fc2w_p, bias_pack]

    def param_spec(a):
        return pl.BlockSpec(a.shape, lambda i: (0, 0))

    in_specs = [pl.BlockSpec((tb, total_in), lambda i: (i, 0))] + \
               [param_spec(a) for a in ordered]

    flops = 2 * b_pad * (drug_in * drug_emb + drug_emb * cell_dim
                         + drug_emb * h0 + cell_dim * h0 + h0 * h1 + h1 * out_pad)
    transcendentals = b_pad * cell_dim                      # sigmoid exp
    param_bytes = sum(int(a.size) * a.dtype.itemsize for a in ordered)
    bytes_accessed = int(x_in.size) * 4 + b_pad * out_pad * 4 + param_bytes

    out = pl.pallas_call(
        _drn_kernel,
        out_shape=jax.ShapeDtypeStruct((b_pad, out_pad), f32),
        grid=(n_blocks,),
        in_specs=in_specs,
        out_specs=pl.BlockSpec((tb, out_pad), lambda i: (i, 0)),
        compiler_params=pltpu.CompilerParams(
            dimension_semantics=("parallel",),
            vmem_limit_bytes=64 * 1024 * 1024),
        cost_estimate=pl.CostEstimate(
            flops=flops, transcendentals=transcendentals, bytes_accessed=bytes_accessed),
    )(x_in, *ordered)

    return out[:B, :1]


def _reference(drug_x, cell_x, p, bn_eps=1e-5):
    """Module-faithful reference (concat + explicit eval-BN), bf16 matmuls / f32 acc."""
    f32 = jnp.float32
    bf16 = jnp.bfloat16
    relu = lambda t: jnp.maximum(t, 0.0)
    mm = lambda a, w: jnp.dot(a.astype(bf16), w.astype(bf16), preferred_element_type=f32)

    d = relu(mm(drug_x, p["dw"]) + p["db"])
    c_w = jax.nn.sigmoid(mm(d, p["aw"]) + p["ab"])
    cell_w = c_w * cell_x
    ctx = jnp.concatenate([d, cell_w], axis=1)
    x = relu(mm(ctx, p["fcw"]) + p["fcb"])
    h = mm(x, p["clw"]) + p["clb"]
    h = (h - p["bnm"]) * jax.lax.rsqrt(p["bnv"] + bn_eps) * p["bng"] + p["bnb"]
    h = relu(h)
    return mm(h, p["fc2w"]) + p["fc2b"]


if __name__ == "__main__":
    key = jax.random.PRNGKey(0)
    B = 256                               # 2 tiles of 128 -> both v7x TensorCores busy
    drug_in, cell_dim = 128, 128
    drug_emb = 128
    fc_hid = [256, 128]                   # DrugResponseNet(fc_hid_dim=[256, 128])
    fc_in_dim = drug_emb + cell_dim

    ks = jax.random.split(key, 20)

    def glorot(k, shape):
        fan_in, fan_out = shape
        lim = (6.0 / (fan_in + fan_out)) ** 0.5
        return jax.random.uniform(k, shape, jnp.float32, -lim, lim)

    params = {
        # drug_embed_net: Linear(drug_in, drug_emb) + ReLU
        "dw": glorot(ks[0], (drug_in, drug_emb)),
        "db": 0.01 * jax.random.normal(ks[1], (1, drug_emb), jnp.float32),
        # attention_net: Linear(drug_emb, cell_dim) + Sigmoid
        "aw": glorot(ks[2], (drug_emb, cell_dim)),
        "ab": 0.01 * jax.random.normal(ks[3], (1, cell_dim), jnp.float32),
        # fc: fc_in_dim -> fc_hid[0]
        "fcw": glorot(ks[4], (fc_in_dim, fc_hid[0])),
        "fcb": 0.01 * jax.random.normal(ks[5], (1, fc_hid[0]), jnp.float32),
        # classifier[0]: Linear fc_hid[0] -> fc_hid[1], BatchNorm1d(fc_hid[1])
        "clw": glorot(ks[6], (fc_hid[0], fc_hid[1])),
        "clb": 0.01 * jax.random.normal(ks[7], (1, fc_hid[1]), jnp.float32),
        "bng": 1.0 + 0.05 * jax.random.normal(ks[8], (1, fc_hid[1]), jnp.float32),
        "bnb": 0.01 * jax.random.normal(ks[9], (1, fc_hid[1]), jnp.float32),
        "bnm": 0.05 * jax.random.normal(ks[10], (1, fc_hid[1]), jnp.float32),
        "bnv": 1.0 + 0.1 * jax.random.uniform(ks[11], (1, fc_hid[1]), jnp.float32),
        # fc2: fc_hid[1] -> 1
        "fc2w": glorot(ks[12], (fc_hid[1], 1)),
        "fc2b": 0.01 * jax.random.normal(ks[13], (1, 1), jnp.float32),
    }

    drug_x = jax.random.normal(ks[14], (B, drug_in), jnp.float32)
    cell_x = jax.random.normal(ks[15], (B, cell_dim), jnp.float32)

    out = drug_response_net(drug_x, cell_x, params, tb=128)
    out = jax.block_until_ready(out)

    ref = _reference(drug_x, cell_x, params)
    assert out.shape == (B, 1)
    max_err = float(jnp.max(jnp.abs(out - ref)))
    assert jnp.allclose(out, ref, atol=5e-2, rtol=5e-2), \
        f"mismatch vs reference (max abs err {max_err})"

    print("KERNEL_OK")
</pallas_src>

<mosaic_0001>
module attributes {stable_mosaic.version = 11 : i64} {
  func.func @_drn_kernel(%arg0: i32, %arg1: memref<128x256xf32, #tpu.memory_space<vmem>>, %arg2: memref<128x128xbf16, #tpu.memory_space<vmem>>, %arg3: memref<128x128xbf16, #tpu.memory_space<vmem>>, %arg4: memref<128x256xbf16, #tpu.memory_space<vmem>>, %arg5: memref<128x256xbf16, #tpu.memory_space<vmem>>, %arg6: memref<256x128xbf16, #tpu.memory_space<vmem>>, %arg7: memref<128x128xbf16, #tpu.memory_space<vmem>>, %arg8: memref<1x768xf32, #tpu.memory_space<vmem>>, %arg9: memref<128x128xf32, #tpu.memory_space<vmem>>) attributes {dimension_semantics = [#tpu.dimension_semantics<parallel>], iteration_bounds = array<i64: 2>, scalar_prefetch = 0 : i64, scratch_operands = 0 : i64, tpu.core_type = #tpu.core_type<tc>, window_params = [{transform_indices = @transform_0, window_bounds = array<i64: 128, 256>}, {pipeline_mode = #tpu.pipeline_mode<synchronous>, transform_indices = @transform_1, window_bounds = array<i64: 128, 128>}, {pipeline_mode = #tpu.pipeline_mode<synchronous>, transform_indices = @transform_2, window_bounds = array<i64: 128, 128>}, {pipeline_mode = #tpu.pipeline_mode<synchronous>, transform_indices = @transform_3, window_bounds = array<i64: 128, 256>}, {pipeline_mode = #tpu.pipeline_mode<synchronous>, transform_indices = @transform_4, window_bounds = array<i64: 128, 256>}, {pipeline_mode = #tpu.pipeline_mode<synchronous>, transform_indices = @transform_5, window_bounds = array<i64: 256, 128>}, {pipeline_mode = #tpu.pipeline_mode<synchronous>, transform_indices = @transform_6, window_bounds = array<i64: 128, 128>}, {pipeline_mode = #tpu.pipeline_mode<synchronous>, transform_indices = @transform_7, window_bounds = array<i64: 1, 768>}, {transform_indices = @transform_8, window_bounds = array<i64: 128, 128>}]} {
    %c0 = arith.constant 0 : index
    %c0_0 = arith.constant 0 : index
    %0 = vector.load %arg1[%c0, %c0_0] : memref<128x256xf32, #tpu.memory_space<vmem>>, vector<128x256xf32>
    %1 = vector.extract_strided_slice %0 {offsets = [0, 0], sizes = [128, 128], strides = [1, 1]} : vector<128x256xf32> to vector<128x128xf32>
    %2 = vector.extract_strided_slice %0 {offsets = [0, 128], sizes = [128, 128], strides = [1, 1]} : vector<128x256xf32> to vector<128x128xf32>
    %3 = arith.truncf %1 : vector<128x128xf32> to vector<128x128xbf16>
    %c0_1 = arith.constant 0 : index
    %c0_2 = arith.constant 0 : index
    %4 = vector.load %arg2[%c0_1, %c0_2] : memref<128x128xbf16, #tpu.memory_space<vmem>>, vector<128x128xbf16>
    %cst = arith.constant dense<0.000000e+00> : vector<128x128xf32>
    %5 = tpu.matmul %3, %4, %cst {dimension_numbers = #tpu.dot_dimension_numbers<[1], [0], [0], [1], [0, 0, 1, 1], [], []>} : vector<128x128xbf16>, vector<128x128xbf16>, vector<128x128xf32> -> vector<128x128xf32>
    %c0_3 = arith.constant 0 : index
    %c0_4 = arith.constant 0 : index
    %6 = vector.load %arg8[%c0_3, %c0_4] : memref<1x768xf32, #tpu.memory_space<vmem>>, vector<1x128xf32>
    %7 = vector.broadcast %6 : vector<1x128xf32> to vector<128x128xf32>
    %8 = arith.addf %5, %7 : vector<128x128xf32>
    %cst_5 = arith.constant 0.000000e+00 : f32
    %9 = vector.broadcast %cst_5 : f32 to vector<128x128xf32>
    %10 = arith.maximumf %8, %9 : vector<128x128xf32>
    %11 = arith.truncf %10 : vector<128x128xf32> to vector<128x128xbf16>
    %c0_6 = arith.constant 0 : index
    %c0_7 = arith.constant 0 : index
    %12 = vector.load %arg3[%c0_6, %c0_7] : memref<128x128xbf16, #tpu.memory_space<vmem>>, vector<128x128xbf16>
    %cst_8 = arith.constant dense<0.000000e+00> : vector<128x128xf32>
    %13 = tpu.matmul %11, %12, %cst_8 {dimension_numbers = #tpu.dot_dimension_numbers<[1], [0], [0], [1], [0, 0, 1, 1], [], []>} : vector<128x128xbf16>, vector<128x128xbf16>, vector<128x128xf32> -> vector<128x128xf32>
    %c0_9 = arith.constant 0 : index
    %c128 = arith.constant 128 : index
    %14 = vector.load %arg8[%c0_9, %c128] : memref<1x768xf32, #tpu.memory_space<vmem>>, vector<1x128xf32>
    %15 = vector.broadcast %14 : vector<1x128xf32> to vector<128x128xf32>
    %16 = arith.addf %13, %15 : vector<128x128xf32>
    %cst_10 = arith.constant 0.000000e+00 : f32
    %17 = vector.broadcast %cst_10 : f32 to vector<128x128xf32>
    %18 = arith.subf %17, %16 : vector<128x128xf32>
    %19 = math.exp %18 : vector<128x128xf32>
    %cst_11 = arith.constant 1.000000e+00 : f32
    %20 = vector.broadcast %cst_11 : f32 to vector<128x128xf32>
    %21 = arith.addf %20, %19 : vector<128x128xf32>
    %cst_12 = arith.constant 1.000000e+00 : f32
    %22 = vector.broadcast %cst_12 : f32 to vector<128x128xf32>
    %23 = arith.divf %22, %21 : vector<128x128xf32>
    %24 = arith.mulf %23, %2 : vector<128x128xf32>
    %25 = arith.truncf %10 : vector<128x128xf32> to vector<128x128xbf16>
    %c0_13 = arith.constant 0 : index
    %c0_14 = arith.constant 0 : index
    %26 = vector.load %arg4[%c0_13, %c0_14] : memref<128x256xbf16, #tpu.memory_space<vmem>>, vector<128x256xbf16>
    %cst_15 = arith.constant dense<0.000000e+00> : vector<128x256xf32>
    %27 = tpu.matmul %25, %26, %cst_15 {dimension_numbers = #tpu.dot_dimension_numbers<[1], [0], [0], [1], [0, 0, 1, 1], [], []>} : vector<128x128xbf16>, vector<128x256xbf16>, vector<128x256xf32> -> vector<128x256xf32>
    %28 = arith.truncf %24 : vector<128x128xf32> to vector<128x128xbf16>
    %c0_16 = arith.constant 0 : index
    %c0_17 = arith.constant 0 : index
    %29 = vector.load %arg5[%c0_16, %c0_17] : memref<128x256xbf16, #tpu.memory_space<vmem>>, vector<128x256xbf16>
    %cst_18 = arith.constant dense<0.000000e+00> : vector<128x256xf32>
    %30 = tpu.matmul %28, %29, %cst_18 {dimension_numbers = #tpu.dot_dimension_numbers<[1], [0], [0], [1], [0, 0, 1, 1], [], []>} : vector<128x128xbf16>, vector<128x256xbf16>, vector<128x256xf32> -> vector<128x256xf32>
    %31 = arith.addf %27, %30 : vector<128x256xf32>
    %c0_19 = arith.constant 0 : index
    %c256 = arith.constant 256 : index
    %32 = vector.load %arg8[%c0_19, %c256] : memref<1x768xf32, #tpu.memory_space<vmem>>, vector<1x256xf32>
    %33 = vector.broadcast %32 : vector<1x256xf32> to vector<128x256xf32>
    %34 = arith.addf %31, %33 : vector<128x256xf32>
    %cst_20 = arith.constant 0.000000e+00 : f32
    %35 = vector.broadcast %cst_20 : f32 to vector<128x256xf32>
    %36 = arith.maximumf %34, %35 : vector<128x256xf32>
    %37 = arith.truncf %36 : vector<128x256xf32> to vector<128x256xbf16>
    %c0_21 = arith.constant 0 : index
    %c0_22 = arith.constant 0 : index
    %38 = vector.load %arg6[%c0_21, %c0_22] : memref<256x128xbf16, #tpu.memory_space<vmem>>, vector<256x128xbf16>
    %cst_23 = arith.constant dense<0.000000e+00> : vector<128x128xf32>
    %39 = tpu.matmul %37, %38, %cst_23 {dimension_numbers = #tpu.dot_dimension_numbers<[1], [0], [0], [1], [0, 0, 1, 1], [], []>} : vector<128x256xbf16>, vector<256x128xbf16>, vector<128x128xf32> -> vector<128x128xf32>
    %c0_24 = arith.constant 0 : index
    %c512 = arith.constant 512 : index
    %40 = vector.load %arg8[%c0_24, %c512] : memref<1x768xf32, #tpu.memory_space<vmem>>, vector<1x128xf32>
    %41 = vector.broadcast %40 : vector<1x128xf32> to vector<128x128xf32>
    %42 = arith.addf %39, %41 : vector<128x128xf32>
    %cst_25 = arith.constant 0.000000e+00 : f32
    %43 = vector.broadcast %cst_25 : f32 to vector<128x128xf32>
    %44 = arith.maximumf %42, %43 : vector<128x128xf32>
    %45 = arith.truncf %44 : vector<128x128xf32> to vector<128x128xbf16>
    %c0_26 = arith.constant 0 : index
    %c0_27 = arith.constant 0 : index
    %46 = vector.load %arg7[%c0_26, %c0_27] : memref<128x128xbf16, #tpu.memory_space<vmem>>, vector<128x128xbf16>
    %cst_28 = arith.constant dense<0.000000e+00> : vector<128x128xf32>
    %47 = tpu.matmul %45, %46, %cst_28 {dimension_numbers = #tpu.dot_dimension_numbers<[1], [0], [0], [1], [0, 0, 1, 1], [], []>} : vector<128x128xbf16>, vector<128x128xbf16>, vector<128x128xf32> -> vector<128x128xf32>
    %c0_29 = arith.constant 0 : index
    %c640 = arith.constant 640 : index
    %48 = vector.load %arg8[%c0_29, %c640] : memref<1x768xf32, #tpu.memory_space<vmem>>, vector<1x128xf32>
    %49 = vector.broadcast %48 : vector<1x128xf32> to vector<128x128xf32>
    %50 = arith.addf %47, %49 : vector<128x128xf32>
    %c0_30 = arith.constant 0 : index
    %c0_31 = arith.constant 0 : index
    %51 = vector.load %arg9[%c0_30, %c0_31] : memref<128x128xf32, #tpu.memory_space<vmem>>, vector<128x128xf32>
    tpu.vector_store %arg9[%c0_30, %c0_31], %50 {strides = array<i32>} : memref<128x128xf32, #tpu.memory_space<vmem>>, vector<128x128xf32>,
    return
  }
  func.func @transform_0(%arg0: i32) -> (i32, i32) {
    %c0_i32 = arith.constant 0 : i32
    %c0_i32_0 = arith.constant 0 : i32
    return %arg0, %c0_i32 : i32, i32
  }
  func.func @transform_1(%arg0: i32) -> (i32, i32) {
    %c0_i32 = arith.constant 0 : i32
    %c0_i32_0 = arith.constant 0 : i32
    %c0_i32_1 = arith.constant 0 : i32
    return %c0_i32, %c0_i32_0 : i32, i32
  }
  func.func @transform_2(%arg0: i32) -> (i32, i32) {
    %c0_i32 = arith.constant 0 : i32
    %c0_i32_0 = arith.constant 0 : i32
    %c0_i32_1 = arith.constant 0 : i32
    return %c0_i32, %c0_i32_0 : i32, i32
  }
  func.func @transform_3(%arg0: i32) -> (i32, i32) {
    %c0_i32 = arith.constant 0 : i32
    %c0_i32_0 = arith.constant 0 : i32
    %c0_i32_1 = arith.constant 0 : i32
    return %c0_i32, %c0_i32_0 : i32, i32
  }
  func.func @transform_4(%arg0: i32) -> (i32, i32) {
    %c0_i32 = arith.constant 0 : i32
    %c0_i32_0 = arith.constant 0 : i32
    %c0_i32_1 = arith.constant 0 : i32
    return %c0_i32, %c0_i32_0 : i32, i32
  }
  func.func @transform_5(%arg0: i32) -> (i32, i32) {
    %c0_i32 = arith.constant 0 : i32
    %c0_i32_0 = arith.constant 0 : i32
    %c0_i32_1 = arith.constant 0 : i32
    return %c0_i32, %c0_i32_0 : i32, i32
  }
  func.func @transform_6(%arg0: i32) -> (i32, i32) {
    %c0_i32 = arith.constant 0 : i32
    %c0_i32_0 = arith.constant 0 : i32
    %c0_i32_1 = arith.constant 0 : i32
    return %c0_i32, %c0_i32_0 : i32, i32
  }
  func.func @transform_7(%arg0: i32) -> (i32, i32) {
    %c0_i32 = arith.constant 0 : i32
    %c0_i32_0 = arith.constant 0 : i32
    %c0_i32_1 = arith.constant 0 : i32
    return %c0_i32, %c0_i32_0 : i32, i32
  }
  func.func @transform_8(%arg0: i32) -> (i32, i32) {
    %c0_i32 = arith.constant 0 : i32
    %c0_i32_0 = arith.constant 0 : i32
    return %arg0, %c0_i32 : i32, i32
  }
}

</mosaic_0001>

<llo_original>
// kernel: tpu_custom_call.1
$region0: #{tpu_custom_call.1}
  #allocation0 [shape = 'u32[]', space=smem, size = 0x4, offset = 0x4, fixed_abs, tag = 'smem constant byte address 0x4 - core index']
  #allocation1 [shape = 'u32[72,128]{1,0:T(1,128)}', space=vmem, size = 0x9000, scoped, tag = 'internal scratch']
  %s0 = inlined_call_operand.hbm [shape: f32[256,256], index: 0, kind: input, shape index: {}]
  %s1 = inlined_call_operand.hbm [shape: bf16[128,128], index: 1, kind: input, shape index: {}]
  %s2 = inlined_call_operand.hbm [shape: bf16[128,128], index: 2, kind: input, shape index: {}]
  %s3 = inlined_call_operand.hbm [shape: bf16[128,256], index: 3, kind: input, shape index: {}]
  %s4 = inlined_call_operand.hbm [shape: bf16[128,256], index: 4, kind: input, shape index: {}]
  %s5 = inlined_call_operand.hbm [shape: bf16[256,128], index: 5, kind: input, shape index: {}]
  %s6 = inlined_call_operand.hbm [shape: bf16[128,128], index: 6, kind: input, shape index: {}]
  %s7 = inlined_call_operand.vmem [shape: f32[1,768], index: 7, kind: input, shape index: {}]
  %s8 = inlined_call_operand.hbm [shape: f32[256,128], index: 8, kind: output, shape index: {}]
  %s9 = sld [smem:[#allocation0]]
  $region93: #{tpu_custom_call.1} parent=0
    _
  %s11 = ssub.s32 1, %s9
  %s12 = scalar_select 0, %s11, %s9
  $region1: #{tpu_custom_call.1} parent=0
    #allocation2 [shape = 'u8[262144]{0}', space=vmem, size = 0x40000, scoped, tag = 'input window, operand 0']
    #allocation3 [shape = 's32[2]{0}', space=sflag, size = 0x8, scoped, tag = 'scoped memory for tpu_custom_call.1']
    #allocation4 [shape = 's32[2]{0}', space=sflag, size = 0x8, scoped, tag = 'scoped memory for tpu_custom_call.1']
    #allocation5 [shape = 'u8[32768]{0}', space=vmem, size = 0x8000, scoped, tag = 'input window, operand 1, single buffered']
    #allocation6 [shape = 's32[1]{0}', space=sflag, size = 0x4, scoped, tag = 'scoped memory for tpu_custom_call.1']
    #allocation7 [shape = 'u8[32768]{0}', space=vmem, size = 0x8000, scoped, tag = 'input window, operand 2, single buffered']
    #allocation8 [shape = 'u8[65536]{0}', space=vmem, size = 0x10000, scoped, tag = 'input window, operand 3, single buffered']
    #allocation9 [shape = 's32[1]{0}', space=sflag, size = 0x4, scoped, tag = 'scoped memory for tpu_custom_call.1']
    #allocation10 [shape = 'u8[65536]{0}', space=vmem, size = 0x10000, scoped, tag = 'input window, operand 4, single buffered']
    #allocation11 [shape = 'u8[65536]{0}', space=vmem, size = 0x10000, scoped, tag = 'input window, operand 5, single buffered']
    #allocation12 [shape = 's32[1]{0}', space=sflag, size = 0x4, scoped, tag = 'scoped memory for tpu_custom_call.1']
    #allocation13 [shape = 'u8[32768]{0}', space=vmem, size = 0x8000, scoped, tag = 'input window, operand 6, single buffered']
    #allocation14 [shape = 'u8[131072]{0}', space=vmem, size = 0x20000, scoped, tag = 'output window, operand 0']
    %13 = vsyncpa [#allocation3], 0
    %s14 = scalar_lea.sflag [#allocation3], 1
    %15 = vsyncpa %s14, 0
    %16 = vsyncpa [#allocation6], 0
    %17 = vsyncpa [#allocation9], 0
    %18 = vsyncpa [#allocation12], 0
    %19 = vsyncpa [#allocation4], 0
    %s20 = scalar_lea.sflag [#allocation4], 1
    %21 = vsyncpa %s20, 0
    loop: start=0, step=1, limit=4
    $region2: #{tpu_custom_call.1} parent=1 // loop_pre_header
      _
    $region3: #{tpu_custom_call.1} parent=1 // loop_header
      %s23 = sphi 0, %s27
      %p24 = scmp.ge.s32.totalorder %s23, 4
      %s33 = sphi 0, %s35
      %s36 = sphi 0, %s33
      %s37 = sphi 0, %s36
      %s53 = sphi 0, %s37
      %s57 = sphi 0, %s57
      %s59 = sphi 0, %s57
      %s60 = sphi 0, %s59
      %s74 = sphi 0, %s60
      %s78 = sphi 0, %s78
      %s80 = sphi 0, %s78
      %s81 = sphi 0, %s80
      %s95 = sphi 0, %s81
      %s99 = sphi 0, %s99
      %s101 = sphi 0, %s99
      %s102 = sphi 0, %s101
      %s116 = sphi 0, %s102
      %s120 = sphi 0, %s120
      %s122 = sphi 0, %s120
      %s123 = sphi 0, %s122
      %s137 = sphi 0, %s123
      %s141 = sphi 0, %s141
      %s143 = sphi 0, %s141
      %s144 = sphi 0, %s143
      %s158 = sphi 0, %s144
      %s162 = sphi 0, %s162
      %s164 = sphi 0, %s162
      %s165 = sphi 0, %s164
      %s179 = sphi 0, %s165
      %s183 = sphi 0, %s183
      %s185 = sphi 0, %s183
      %s186 = sphi 0, %s185
      %s200 = sphi 0, %s186
      %s206 = sphi 0, %s208
      %s209 = sphi 0, %s206
      %s210 = sphi 0, %s209
      %s226 = sphi 0, %s210
    $region4: #{tpu_custom_call.1} parent=1 // loop_header_branch
      %26 = sbr.rel (%p24) target = $region8
    $region5: #{tpu_custom_call.1} parent=1 // loop_body
      %s28 = ssub.s32 %s23, 1
      %s29 = ssub.s32 %s23, 2
      %s30 = sadd.s32 %s23, 1
      %s31 = ssub.s32 %s23, %s30
      %p32 = scmp.eq.s32.totalorder %s31, 0
      %s34 = sadd.s32 %s33, 1
      %s35 = scalar_select %p32, %s33, %s34
      %p38 = pneg %p32
      %p39 = scmp.eq.s32.totalorder %s23, 1
      %p40 = por %p38, %p39
      %p41 = scmp.ne.s32.totalorder %s33, %s36
      %p42 = scmp.eq.s32.totalorder %s23, 0
      %p43 = por %p41, %p42
      %p44 = scmp.ne.s32.totalorder %s33, %s36
      %p45 = scmp.eq.s32.totalorder %s28, 1
      %p46 = por %p44, %p45
      %p47 = scmp.ne.s32.totalorder %s36, %s37
      %p48 = scmp.eq.s32.totalorder %s28, 0
      %p49 = por %p47, %p48
      %p50 = scmp.ne.s32.totalorder %s36, %s37
      %p51 = scmp.eq.s32.totalorder %s29, 1
      %p52 = por %p50, %p51
      %p54 = scmp.ne.s32.totalorder %s37, %s53
      %p55 = scmp.eq.s32.totalorder %s29, 0
      %p56 = por %p54, %p55
      %s58 = sadd.s32 %s57, 1
      %p61 = scmp.eq.s32.totalorder %s23, 1
      %p62 = scmp.ne.s32.totalorder %s57, %s59
      %p63 = scmp.eq.s32.totalorder %s23, 0
      %p64 = por %p62, %p63
      %p65 = scmp.ne.s32.totalorder %s57, %s59
      %p66 = scmp.eq.s32.totalorder %s28, 1
      %p67 = por %p65, %p66
      %p68 = scmp.ne.s32.totalorder %s59, %s60
      %p69 = scmp.eq.s32.totalorder %s28, 0
      %p70 = por %p68, %p69
      %p71 = scmp.ne.s32.totalorder %s59, %s60
      %p72 = scmp.eq.s32.totalorder %s29, 1
      %p73 = por %p71, %p72
      %p75 = scmp.ne.s32.totalorder %s60, %s74
      %p76 = scmp.eq.s32.totalorder %s29, 0
      %p77 = por %p75, %p76
      %s79 = sadd.s32 %s78, 1
      %p82 = scmp.eq.s32.totalorder %s23, 1
      %p83 = scmp.ne.s32.totalorder %s78, %s80
      %p84 = scmp.eq.s32.totalorder %s23, 0
      %p85 = por %p83, %p84
      %p86 = scmp.ne.s32.totalorder %s78, %s80
      %p87 = scmp.eq.s32.totalorder %s28, 1
      %p88 = por %p86, %p87
      %p89 = scmp.ne.s32.totalorder %s80, %s81
      %p90 = scmp.eq.s32.totalorder %s28, 0
      %p91 = por %p89, %p90
      %p92 = scmp.ne.s32.totalorder %s80, %s81
      %p93 = scmp.eq.s32.totalorder %s29, 1
      %p94 = por %p92, %p93
      %p96 = scmp.ne.s32.totalorder %s81, %s95
      %p97 = scmp.eq.s32.totalorder %s29, 0
      %p98 = por %p96, %p97
      %s100 = sadd.s32 %s99, 1
      %p103 = scmp.eq.s32.totalorder %s23, 1
      %p104 = scmp.ne.s32.totalorder %s99, %s101
      %p105 = scmp.eq.s32.totalorder %s23, 0
      %p106 = por %p104, %p105
      %p107 = scmp.ne.s32.totalorder %s99, %s101
      %p108 = scmp.eq.s32.totalorder %s28, 1
      %p109 = por %p107, %p108
      %p110 = scmp.ne.s32.totalorder %s101, %s102
      %p111 = scmp.eq.s32.totalorder %s28, 0
      %p112 = por %p110, %p111
      %p113 = scmp.ne.s32.totalorder %s101, %s102
      %p114 = scmp.eq.s32.totalorder %s29, 1
      %p115 = por %p113, %p114
      %p117 = scmp.ne.s32.totalorder %s102, %s116
      %p118 = scmp.eq.s32.totalorder %s29, 0
      %p119 = por %p117, %p118
      %s121 = sadd.s32 %s120, 1
      %p124 = scmp.eq.s32.totalorder %s23, 1
      %p125 = scmp.ne.s32.totalorder %s120, %s122
      %p126 = scmp.eq.s32.totalorder %s23, 0
      %p127 = por %p125, %p126
      %p128 = scmp.ne.s32.totalorder %s120, %s122
      %p129 = scmp.eq.s32.totalorder %s28, 1
      %p130 = por %p128, %p129
      %p131 = scmp.ne.s32.totalorder %s122, %s123
      %p132 = scmp.eq.s32.totalorder %s28, 0
      %p133 = por %p131, %p132
      %p134 = scmp.ne.s32.totalorder %s122, %s123
      %p135 = scmp.eq.s32.totalorder %s29, 1
      %p136 = por %p134, %p135
      %p138 = scmp.ne.s32.totalorder %s123, %s137
      %p139 = scmp.eq.s32.totalorder %s29, 0
      %p140 = por %p138, %p139
      %s142 = sadd.s32 %s141, 1
      %p145 = scmp.eq.s32.totalorder %s23, 1
      %p146 = scmp.ne.s32.totalorder %s141, %s143
      %p147 = scmp.eq.s32.totalorder %s23, 0
      %p148 = por %p146, %p147
      %p149 = scmp.ne.s32.totalorder %s141, %s143
      %p150 = scmp.eq.s32.totalorder %s28, 1
      %p151 = por %p149, %p150
      %p152 = scmp.ne.s32.totalorder %s143, %s144
      %p153 = scmp.eq.s32.totalorder %s28, 0
      %p154 = por %p152, %p153
      %p155 = scmp.ne.s32.totalorder %s143, %s144
      %p156 = scmp.eq.s32.totalorder %s29, 1
      %p157 = por %p155, %p156
      %p159 = scmp.ne.s32.totalorder %s144, %s158
      %p160 = scmp.eq.s32.totalorder %s29, 0
      %p161 = por %p159, %p160
      %s163 = sadd.s32 %s162, 1
      %p166 = scmp.eq.s32.totalorder %s23, 1
      %p167 = scmp.ne.s32.totalorder %s162, %s164
      %p168 = scmp.eq.s32.totalorder %s23, 0
      %p169 = por %p167, %p168
      %p170 = scmp.ne.s32.totalorder %s162, %s164
      %p171 = scmp.eq.s32.totalorder %s28, 1
      %p172 = por %p170, %p171
      %p173 = scmp.ne.s32.totalorder %s164, %s165
      %p174 = scmp.eq.s32.totalorder %s28, 0
      %p175 = por %p173, %p174
      %p176 = scmp.ne.s32.totalorder %s164, %s165
      %p177 = scmp.eq.s32.totalorder %s29, 1
      %p178 = por %p176, %p177
      %p180 = scmp.ne.s32.totalorder %s165, %s179
      %p181 = scmp.eq.s32.totalorder %s29, 0
      %p182 = por %p180, %p181
      %s184 = sadd.s32 %s183, 1
      %p187 = scmp.eq.s32.totalorder %s23, 1
      %p188 = scmp.ne.s32.totalorder %s183, %s185
      %p189 = scmp.eq.s32.totalorder %s23, 0
      %p190 = por %p188, %p189
      %p191 = scmp.ne.s32.totalorder %s183, %s185
      %p192 = scmp.eq.s32.totalorder %s28, 1
      %p193 = por %p191, %p192
      %p194 = scmp.ne.s32.totalorder %s185, %s186
      %p195 = scmp.eq.s32.totalorder %s28, 0
      %p196 = por %p194, %p195
      %p197 = scmp.ne.s32.totalorder %s185, %s186
      %p198 = scmp.eq.s32.totalorder %s29, 1
      %p199 = por %p197, %p198
      %p201 = scmp.ne.s32.totalorder %s186, %s200
      %p202 = scmp.eq.s32.totalorder %s29, 0
      %p203 = por %p201, %p202
      %s204 = ssub.s32 %s23, %s30
      %p205 = scmp.eq.s32.totalorder %s204, 0
      %s207 = sadd.s32 %s206, 1
      %s208 = scalar_select %p205, %s206, %s207
      %p211 = pneg %p205
      %p212 = scmp.eq.s32.totalorder %s23, 1
      %p213 = por %p211, %p212
      %p214 = scmp.ne.s32.totalorder %s206, %s209
      %p215 = scmp.eq.s32.totalorder %s23, 0
      %p216 = por %p214, %p215
      %p217 = scmp.ne.s32.totalorder %s206, %s209
      %p218 = scmp.eq.s32.totalorder %s28, 1
      %p219 = por %p217, %p218
      %p220 = scmp.ne.s32.totalorder %s209, %s210
      %p221 = scmp.eq.s32.totalorder %s28, 0
      %p222 = por %p220, %p221
      %p223 = scmp.ne.s32.totalorder %s209, %s210
      %p224 = scmp.eq.s32.totalorder %s29, 1
      %p225 = por %p223, %p224
      %p227 = scmp.ne.s32.totalorder %s210, %s226
      %p228 = scmp.eq.s32.totalorder %s29, 0
      %p229 = por %p227, %p228
      %p230 = scmp.le.s32.totalorder 1, %s23
      %p231 = scmp.lt.s32.totalorder %s23, 3
      %p232 = pnand %p230, %p231
      %p233 = pneg %p232
      // Predicated region
      $region9: #{tpu_custom_call.1} parent=5 // pred_check
        _
      $region10: #{tpu_custom_call.1} parent=5 // pred_check_branch
        %235 = sbr.rel (%p232) target = $region12
      $region11: #{tpu_custom_call.1} parent=5 // pred_region
        %s236 = ssub.s32 %s23, 1
        // Predicated region
        $region13: #{tpu_custom_call.1} parent=11 // pred_check
          %p237 = pneg %p70
        $region14: #{tpu_custom_call.1} parent=11 // pred_check_branch
          %239 = sbr.rel (%p237) target = $region16
        $region15: #{tpu_custom_call.1} parent=11 // pred_region
          %241 = vsyncadd [#allocation6], 0
          %s242 = sshll.u32 %s1, 4
          %s243 = int_to_ptr.hbm [resolvable:$true] %s242
          %s244 = sshll.u32 [#allocation5], 4
          %s245 = int_to_ptr.vmem [resolvable:$true] %s244
          %250 = dma.hbm_to_vmem [thread:$0]  %s243, 1024, %s245, [#allocation6], 64, 64, 4
        $region16: #{tpu_custom_call.1} parent=11 // pred_fallthru
          _
        // Predicated region
        $region17: #{tpu_custom_call.1} parent=11 // pred_check
          %p251 = pneg %p91
        $region18: #{tpu_custom_call.1} parent=11 // pred_check_branch
          %253 = sbr.rel (%p251) target = $region20
        $region19: #{tpu_custom_call.1} parent=11 // pred_region
          %255 = vsyncadd [#allocation6], 0
          %s256 = sshll.u32 %s2, 4
          %s257 = int_to_ptr.hbm [resolvable:$true] %s256
          %s258 = sshll.u32 [#allocation7], 4
          %s259 = int_to_ptr.vmem [resolvable:$true] %s258
          %264 = dma.hbm_to_vmem [thread:$0]  %s257, 1024, %s259, [#allocation6], 64, 64, 4
        $region20: #{tpu_custom_call.1} parent=11 // pred_fallthru
          _
        // Predicated region
        $region21: #{tpu_custom_call.1} parent=11 // pred_check
          %p265 = pneg %p112
        $region22: #{tpu_custom_call.1} parent=11 // pred_check_branch
          %267 = sbr.rel (%p265) target = $region24
        $region23: #{tpu_custom_call.1} parent=11 // pred_region
          %269 = vsyncadd [#allocation9], 0
          %s270 = sshll.u32 %s3, 4
          %s271 = int_to_ptr.hbm [resolvable:$true] %s270
          %s272 = sshll.u32 [#allocation8], 4
          %s273 = int_to_ptr.vmem [resolvable:$true] %s272
          %278 = dma.hbm_to_vmem [thread:$0]  %s271, 2048, %s273, [#allocation9], 128, 128, 8
        $region24: #{tpu_custom_call.1} parent=11 // pred_fallthru
          _
        // Predicated region
        $region25: #{tpu_custom_call.1} parent=11 // pred_check
          %p279 = pneg %p133
        $region26: #{tpu_custom_call.1} parent=11 // pred_check_branch
          %281 = sbr.rel (%p279) target = $region28
        $region27: #{tpu_custom_call.1} parent=11 // pred_region
          %283 = vsyncadd [#allocation9], 0
          %s284 = sshll.u32 %s4, 4
          %s285 = int_to_ptr.hbm [resolvable:$true] %s284
          %s286 = sshll.u32 [#allocation10], 4
          %s287 = int_to_ptr.vmem [resolvable:$true] %s286
          %292 = dma.hbm_to_vmem [thread:$0]  %s285, 2048, %s287, [#allocation9], 128, 128, 8
        $region28: #{tpu_custom_call.1} parent=11 // pred_fallthru
          _
        // Predicated region
        $region29: #{tpu_custom_call.1} parent=11 // pred_check
          %p293 = pneg %p154
        $region30: #{tpu_custom_call.1} parent=11 // pred_check_branch
          %295 = sbr.rel (%p293) target = $region32
        $region31: #{tpu_custom_call.1} parent=11 // pred_region
          %297 = vsyncadd [#allocation12], 0
          %s298 = sshll.u32 %s5, 4
          %s299 = int_to_ptr.hbm [resolvable:$true] %s298
          %s300 = sshll.u32 [#allocation11], 4
          %s301 = int_to_ptr.vmem [resolvable:$true] %s300
          %306 = dma.hbm_to_vmem [thread:$0]  %s299, 2048, %s301, [#allocation12], 64, 64, 4
        $region32: #{tpu_custom_call.1} parent=11 // pred_fallthru
          _
        // Predicated region
        $region33: #{tpu_custom_call.1} parent=11 // pred_check
          %p307 = pneg %p175
        $region34: #{tpu_custom_call.1} parent=11 // pred_check_branch
          %309 = sbr.rel (%p307) target = $region36
        $region35: #{tpu_custom_call.1} parent=11 // pred_region
          %311 = vsyncadd [#allocation12], 0
          %s312 = sshll.u32 %s6, 4
          %s313 = int_to_ptr.hbm [resolvable:$true] %s312
          %s314 = sshll.u32 [#allocation13], 4
          %s315 = int_to_ptr.vmem [resolvable:$true] %s314
          %320 = dma.hbm_to_vmem [thread:$0]  %s313, 1024, %s315, [#allocation12], 64, 64, 4
        $region36: #{tpu_custom_call.1} parent=11 // pred_fallthru
          _
        // Predicated region
        $region37: #{tpu_custom_call.1} parent=11 // pred_check
          %p321 = pneg %p196
        $region38: #{tpu_custom_call.1} parent=11 // pred_check_branch
          %323 = sbr.rel (%p321) target = $region40
        $region39: #{tpu_custom_call.1} parent=11 // pred_region
          _
        $region40: #{tpu_custom_call.1} parent=11 // pred_fallthru
          _
      $region12: #{tpu_custom_call.1} parent=5 // pred_fallthru
        _
      %p324 = scmp.lt.s32.totalorder %s23, 2
      // Predicated region
      $region41: #{tpu_custom_call.1} parent=5 // pred_check
        %p325 = pneg %p324
      $region42: #{tpu_custom_call.1} parent=5 // pred_check_branch
        %327 = sbr.rel (%p325) target = $region44
      $region43: #{tpu_custom_call.1} parent=5 // pred_region
        // Predicated region
        $region45: #{tpu_custom_call.1} parent=43 // pred_check
          %p328 = pneg %p43
        $region46: #{tpu_custom_call.1} parent=43 // pred_check_branch
          %330 = sbr.rel (%p328) target = $region48
        $region47: #{tpu_custom_call.1} parent=43 // pred_region
          %s331 = sand.u32 %s33, 1
          %s332 = scalar_lea.sflag [#allocation3], %s331
          %s333 = sand.u32 %s33, 1
          %s334 = smul.addr %s333, 256
          %s335 = scalar_lea.vmem [#allocation2], %s334
          %s336 = smul.u32 16, %s23
          %338 = vsyncadd %s332, 0
          %s339 = smul.addr %s336, 2
          %s340 = smul.addr %s339, 8
          %s341 = scalar_lea.hbm %s0, %s340
          %s342 = sshll.u32 %s341, 4
          %s343 = int_to_ptr.hbm [resolvable:$true] %s342
          %s344 = sshll.u32 %s335, 4
          %s345 = int_to_ptr.vmem [resolvable:$true] %s344
          %350 = dma.hbm_to_vmem [thread:$0]  %s343, 4096, %s345, %s332, 256, 256, 16
        $region48: #{tpu_custom_call.1} parent=43 // pred_fallthru
          _
      $region44: #{tpu_custom_call.1} parent=5 // pred_fallthru
        _
      %p351 = scmp.le.s32.totalorder 1, %s23
      %p352 = scmp.lt.s32.totalorder %s23, 3
      %p353 = pnand %p351, %p352
      %p354 = pneg %p353
      // Predicated region
      $region49: #{tpu_custom_call.1} parent=5 // pred_check
        _
      $region50: #{tpu_custom_call.1} parent=5 // pred_check_branch
        %356 = sbr.rel (%p353) target = $region52
      $region51: #{tpu_custom_call.1} parent=5 // pred_region
        %s357 = ssub.s32 %s23, 1
        %s358 = sand.u32 %s36, 1
        %s359 = scalar_lea.sflag [#allocation3], %s358
        %s360 = sand.u32 %s36, 1
        %s361 = smul.addr %s360, 256
        %s362 = scalar_lea.vmem [#allocation2], %s361
        // Predicated region
        $region53: #{tpu_custom_call.1} parent=51 // pred_check
          %p363 = pneg %p49
        $region54: #{tpu_custom_call.1} parent=51 // pred_check_branch
          %365 = sbr.rel (%p363) target = $region56
        $region55: #{tpu_custom_call.1} parent=51 // pred_region
          %367 = dma.done %s359, 4096
        $region56: #{tpu_custom_call.1} parent=51 // pred_fallthru
          _
        // Predicated region
        $region57: #{tpu_custom_call.1} parent=51 // pred_check
          %p368 = pneg %p70
        $region58: #{tpu_custom_call.1} parent=51 // pred_check_branch
          %370 = sbr.rel (%p368) target = $region60
        $region59: #{tpu_custom_call.1} parent=51 // pred_region
          %372 = dma.done [#allocation6], 1024
        $region60: #{tpu_custom_call.1} parent=51 // pred_fallthru
          _
        // Predicated region
        $region61: #{tpu_custom_call.1} parent=51 // pred_check
          %p373 = pneg %p91
        $region62: #{tpu_custom_call.1} parent=51 // pred_check_branch
          %375 = sbr.rel (%p373) target = $region64
        $region63: #{tpu_custom_call.1} parent=51 // pred_region
          %377 = dma.done [#allocation6], 1024
        $region64: #{tpu_custom_call.1} parent=51 // pred_fallthru
          _
        // Predicated region
        $region65: #{tpu_custom_call.1} parent=51 // pred_check
          %p378 = pneg %p112
        $region66: #{tpu_custom_call.1} parent=51 // pred_check_branch
          %380 = sbr.rel (%p378) target = $region68
        $region67: #{tpu_custom_call.1} parent=51 // pred_region
          %382 = dma.done [#allocation9], 2048
        $region68: #{tpu_custom_call.1} parent=51 // pred_fallthru
          _
        // Predicated region
        $region69: #{tpu_custom_call.1} parent=51 // pred_check
          %p383 = pneg %p133
        $region70: #{tpu_custom_call.1} parent=51 // pred_check_branch
          %385 = sbr.rel (%p383) target = $region72
        $region71: #{tpu_custom_call.1} parent=51 // pred_region
          %387 = dma.done [#allocation9], 2048
        $region72: #{tpu_custom_call.1} parent=51 // pred_fallthru
          _
        // Predicated region
        $region73: #{tpu_custom_call.1} parent=51 // pred_check
          %p388 = pneg %p154
        $region74: #{tpu_custom_call.1} parent=51 // pred_check_branch
          %390 = sbr.rel (%p388) target = $region76
        $region75: #{tpu_custom_call.1} parent=51 // pred_region
          %392 = dma.done [#allocation12], 2048
        $region76: #{tpu_custom_call.1} parent=51 // pred_fallthru
          _
        // Predicated region
        $region77: #{tpu_custom_call.1} parent=51 // pred_check
          %p393 = pneg %p175
        $region78: #{tpu_custom_call.1} parent=51 // pred_check_branch
          %395 = sbr.rel (%p393) target = $region80
        $region79: #{tpu_custom_call.1} parent=51 // pred_region
          %397 = dma.done [#allocation12], 1024
        $region80: #{tpu_custom_call.1} parent=51 // pred_fallthru
          _
        %s398 = sand.u32 %s36, 1
        %s399 = scalar_lea.sflag [#allocation3], %s398
        %s400 = sand.u32 %s36, 1
        %s401 = smul.addr %s400, 256
        %s402 = scalar_lea.vmem [#allocation2], %s401
        %p403 = pneg %p49
        %p404 = pneg %p46
        %p405 = pneg %p70
        %p406 = pneg %p67
        %p407 = pneg %p91
        %p408 = pneg %p88
        %p409 = pneg %p112
        %p410 = pneg %p109
        %p411 = pneg %p133
        %p412 = pneg %p130
        %p413 = pneg %p154
        %p414 = pneg %p151
        %p415 = pneg %p175
        %p416 = pneg %p172
        %p417 = pneg %p196
        %p418 = pneg %p193
        %p419 = pneg %p222
        %p420 = pneg %p219
        %s421 = sand.u32 %s209, 1
        %s422 = scalar_lea.sflag [#allocation4], %s421
        %s423 = sand.u32 %s209, 1
        %s424 = smul.addr %s423, 128
        %s425 = scalar_lea.vmem [#allocation14], %s424
        %s426 = smul.u32 16, %s28
        %s427 = smul.u32 16, %s28
        %v428 = vld [vmem:[%s362] sm:$0xff]
        %v429 = vld [vmem:[%s362 + $0x8] sm:$0xff]
        %v430 = vld [vmem:[%s362 + $0x10] sm:$0xff]
        %v431 = vld [vmem:[%s362 + $0x18] sm:$0xff]
        %v432 = vld [vmem:[%s362 + $0x20] sm:$0xff]
        %v433 = vld [vmem:[%s362 + $0x28] sm:$0xff]
        %v434 = vld [vmem:[%s362 + $0x30] sm:$0xff]
        %v435 = vld [vmem:[%s362 + $0x38] sm:$0xff]
        %v436 = vld [vmem:[%s362 + $0x40] sm:$0xff]
        %v437 = vld [vmem:[%s362 + $0x48] sm:$0xff]
        %v438 = vld [vmem:[%s362 + $0x50] sm:$0xff]
        %v439 = vld [vmem:[%s362 + $0x58] sm:$0xff]
        %v440 = vld [vmem:[%s362 + $0x60] sm:$0xff]
        %v441 = vld [vmem:[%s362 + $0x68] sm:$0xff]
        %v442 = vld [vmem:[%s362 + $0x70] sm:$0xff]
        %v443 = vld [vmem:[%s362 + $0x78] sm:$0xff]
        %v444 = vld [vmem:[%s362 + $0x80] sm:$0xff]
        %v445 = vld [vmem:[%s362 + $0x88] sm:$0xff]
        %v446 = vld [vmem:[%s362 + $0x90] sm:$0xff]
        %v447 = vld [vmem:[%s362 + $0x98] sm:$0xff]
        %v448 = vld [vmem:[%s362 + $0xa0] sm:$0xff]
        %v449 = vld [vmem:[%s362 + $0xa8] sm:$0xff]
        %v450 = vld [vmem:[%s362 + $0xb0] sm:$0xff]
        %v451 = vld [vmem:[%s362 + $0xb8] sm:$0xff]
        %v452 = vld [vmem:[%s362 + $0xc0] sm:$0xff]
        %v453 = vld [vmem:[%s362 + $0xc8] sm:$0xff]
        %v454 = vld [vmem:[%s362 + $0xd0] sm:$0xff]
        %v455 = vld [vmem:[%s362 + $0xd8] sm:$0xff]
        %v456 = vld [vmem:[%s362 + $0xe0] sm:$0xff]
        %v457 = vld [vmem:[%s362 + $0xe8] sm:$0xff]
        %v458 = vld [vmem:[%s362 + $0xf0] sm:$0xff]
        %v459 = vld [vmem:[%s362 + $0xf8] sm:$0xff]
        %v460 = vpack.c.bf16 %v430, %v428
        %v461 = vpack.c.bf16 %v434, %v432
        %v462 = vpack.c.bf16 %v438, %v436
        %v463 = vpack.c.bf16 %v442, %v440
        %v464 = vpack.c.bf16 %v446, %v444
        %v465 = vpack.c.bf16 %v450, %v448
        %v466 = vpack.c.bf16 %v454, %v452
        %v467 = vpack.c.bf16 %v458, %v456
        %v468 = vld [vmem:[#allocation5] sm:$0xf]
        %v469 = vld [vmem:[#allocation5 + $0x4] sm:$0xf]
        %v470 = vld [vmem:[#allocation5 + $0x8] sm:$0xf]
        %v471 = vld [vmem:[#allocation5 + $0xc] sm:$0xf]
        %v472 = vld [vmem:[#allocation5 + $0x10] sm:$0xf]
        %v473 = vld [vmem:[#allocation5 + $0x14] sm:$0xf]
        %v474 = vld [vmem:[#allocation5 + $0x18] sm:$0xf]
        %v475 = vld [vmem:[#allocation5 + $0x1c] sm:$0xf]
        %v476 = vld [vmem:[#allocation5 + $0x20] sm:$0xf]
        %v477 = vld [vmem:[#allocation5 + $0x24] sm:$0xf]
        %v478 = vld [vmem:[#allocation5 + $0x28] sm:$0xf]
        %v479 = vld [vmem:[#allocation5 + $0x2c] sm:$0xf]
        %v480 = vld [vmem:[#allocation5 + $0x30] sm:$0xf]
        %v481 = vld [vmem:[#allocation5 + $0x34] sm:$0xf]
        %v482 = vld [vmem:[#allocation5 + $0x38] sm:$0xf]
        %v483 = vld [vmem:[#allocation5 + $0x3c] sm:$0xf]
        %v484 = vld [vmem:[%s7] sm:$0x1]
        %v486 = vperm.slane %v484, 0
        %v504 = vunpack.c.l.b16 %v468
        %v505 = vunpack.c.l.b16 %v469
        %v506 = vunpack.c.l.b16 %v470
        %v507 = vunpack.c.l.b16 %v471
        %v508 = vunpack.c.l.b16 %v472
        %v509 = vunpack.c.l.b16 %v473
        %v510 = vunpack.c.l.b16 %v474
        %v511 = vunpack.c.l.b16 %v475
        %v512 = vunpack.c.l.b16 %v476
        %v513 = vunpack.c.l.b16 %v477
        %v514 = vunpack.c.l.b16 %v478
        %v515 = vunpack.c.l.b16 %v479
        %v516 = vunpack.c.l.b16 %v480
        %v517 = vunpack.c.l.b16 %v481
        %v518 = vunpack.c.l.b16 %v482
        %v519 = vunpack.c.l.b16 %v483
        %v520 = vpack.c.b16 %v505, %v504
        %v521 = vpack.c.b16 %v507, %v506
        %v522 = vpack.c.b16 %v509, %v508
        %v523 = vpack.c.b16 %v511, %v510
        %v524 = vpack.c.b16 %v513, %v512
        %v525 = vpack.c.b16 %v515, %v514
        %v526 = vpack.c.b16 %v517, %v516
        %v527 = vpack.c.b16 %v519, %v518
        %536 = vmatpush.bf16.msra.mxu0 %v527
        %537 = vmatpush.bf16.msra.mxu0 %v526
        %538 = vmatpush.bf16.msra.mxu0 %v525
        %539 = vmatpush.bf16.msra.mxu0 %v524
        %540 = vmatpush.bf16.msra.mxu0 %v523
        %541 = vmatpush.bf16.msra.mxu0 %v522
        %542 = vmatpush.bf16.msra.mxu0 %v521
        %543 = vmatpush.bf16.msra.mxu0 %v520
        %544 = vmatmul.bf16.gmra.mxu0 %v460
        %v545 = vpop.f32.mrf.mxu0
        %v546 = vadd.f32 %v486, %v545
        %v547 = vpop.f32.mrf.mxu0
        %v548 = vadd.f32 %v486, %v547
        %549 = vmatmul.bf16.gmra.mxu0 %v461
        %v550 = vpop.f32.mrf.mxu0
        %v551 = vadd.f32 %v486, %v550
        %v552 = vpop.f32.mrf.mxu0
        %v553 = vadd.f32 %v486, %v552
        %554 = vmatmul.bf16.gmra.mxu0 %v462
        %v555 = vpop.f32.mrf.mxu0
        %v556 = vadd.f32 %v486, %v555
        %v557 = vpop.f32.mrf.mxu0
        %v558 = vadd.f32 %v486, %v557
        %559 = vmatmul.bf16.gmra.mxu0 %v463
        %v560 = vpop.f32.mrf.mxu0
        %v561 = vadd.f32 %v486, %v560
        %v562 = vpop.f32.mrf.mxu0
        %v563 = vadd.f32 %v486, %v562
        %564 = vmatmul.bf16.gmra.mxu0 %v464
        %v565 = vpop.f32.mrf.mxu0
        %v566 = vadd.f32 %v486, %v565
        %v567 = vpop.f32.mrf.mxu0
        %v568 = vadd.f32 %v486, %v567
        %569 = vmatmul.bf16.gmra.mxu0 %v465
        %v570 = vpop.f32.mrf.mxu0
        %v571 = vadd.f32 %v486, %v570
        %v572 = vpop.f32.mrf.mxu0
        %v573 = vadd.f32 %v486, %v572
        %574 = vmatmul.bf16.gmra.mxu0 %v466
        %v575 = vpop.f32.mrf.mxu0
        %v576 = vadd.f32 %v486, %v575
        %v577 = vpop.f32.mrf.mxu0
        %v578 = vadd.f32 %v486, %v577
        %579 = vmatmul.bf16.gmra.mxu0 %v467
        %v580 = vpop.f32.mrf.mxu0
        %v581 = vadd.f32 %v486, %v580
        %v582 = vpop.f32.mrf.mxu0
        %v583 = vadd.f32 %v486, %v582
        %584 = vdwg.mxu0
        %v585 = vmax.f32 %v546, 0.0
        %v586 = vmax.f32 %v548, 0.0
        %v587 = vmax.f32 %v551, 0.0
        %v588 = vmax.f32 %v553, 0.0
        %v589 = vmax.f32 %v556, 0.0
        %v590 = vmax.f32 %v558, 0.0
        %v591 = vmax.f32 %v561, 0.0
        %v592 = vmax.f32 %v563, 0.0
        %v593 = vmax.f32 %v566, 0.0
        %v594 = vmax.f32 %v568, 0.0
        %v595 = vmax.f32 %v571, 0.0
        %v596 = vmax.f32 %v573, 0.0
        %v597 = vmax.f32 %v576, 0.0
        %v598 = vmax.f32 %v578, 0.0
        %v599 = vmax.f32 %v581, 0.0
        %v600 = vmax.f32 %v583, 0.0
        %v601 = vpack.c.bf16 %v586, %v585
        %v602 = vpack.c.bf16 %v588, %v587
        %v603 = vpack.c.bf16 %v590, %v589
        %v604 = vpack.c.bf16 %v592, %v591
        %v605 = vpack.c.bf16 %v594, %v593
        %v606 = vpack.c.bf16 %v596, %v595
        %v607 = vpack.c.bf16 %v598, %v597
        %v608 = vpack.c.bf16 %v600, %v599
        %v609 = vld [vmem:[#allocation7] sm:$0xf]
        %v610 = vld [vmem:[#allocation7 + $0x4] sm:$0xf]
        %v611 = vld [vmem:[#allocation7 + $0x8] sm:$0xf]
        %v612 = vld [vmem:[#allocation7 + $0xc] sm:$0xf]
        %v613 = vld [vmem:[#allocation7 + $0x10] sm:$0xf]
        %v614 = vld [vmem:[#allocation7 + $0x14] sm:$0xf]
        %v615 = vld [vmem:[#allocation7 + $0x18] sm:$0xf]
        %v616 = vld [vmem:[#allocation7 + $0x1c] sm:$0xf]
        %v617 = vld [vmem:[#allocation7 + $0x20] sm:$0xf]
        %v618 = vld [vmem:[#allocation7 + $0x24] sm:$0xf]
        %v619 = vld [vmem:[#allocation7 + $0x28] sm:$0xf]
        %v620 = vld [vmem:[#allocation7 + $0x2c] sm:$0xf]
        %v621 = vld [vmem:[#allocation7 + $0x30] sm:$0xf]
        %v622 = vld [vmem:[#allocation7 + $0x34] sm:$0xf]
        %v623 = vld [vmem:[#allocation7 + $0x38] sm:$0xf]
        %v624 = vld [vmem:[#allocation7 + $0x3c] sm:$0xf]
        %v625 = vld [vmem:[%s7 + $0x1] sm:$0x1]
        %v627 = vperm.slane %v625, 0
        %v645 = vunpack.c.l.b16 %v609
        %v646 = vunpack.c.l.b16 %v610
        %v647 = vunpack.c.l.b16 %v611
        %v648 = vunpack.c.l.b16 %v612
        %v649 = vunpack.c.l.b16 %v613
        %v650 = vunpack.c.l.b16 %v614
        %v651 = vunpack.c.l.b16 %v615
        %v652 = vunpack.c.l.b16 %v616
        %v653 = vunpack.c.l.b16 %v617
        %v654 = vunpack.c.l.b16 %v618
        %v655 = vunpack.c.l.b16 %v619
        %v656 = vunpack.c.l.b16 %v620
        %v657 = vunpack.c.l.b16 %v621
        %v658 = vunpack.c.l.b16 %v622
        %v659 = vunpack.c.l.b16 %v623
        %v660 = vunpack.c.l.b16 %v624
        %v661 = vpack.c.b16 %v646, %v645
        %v662 = vpack.c.b16 %v648, %v647
        %v663 = vpack.c.b16 %v650, %v649
        %v664 = vpack.c.b16 %v652, %v651
        %v665 = vpack.c.b16 %v654, %v653
        %v666 = vpack.c.b16 %v656, %v655
        %v667 = vpack.c.b16 %v658, %v657
        %v668 = vpack.c.b16 %v660, %v659
        %677 = vmatpush.bf16.msra.mxu0 %v668
        %678 = vmatpush.bf16.msra.mxu0 %v667
        %679 = vmatpush.bf16.msra.mxu0 %v666
        %680 = vmatpush.bf16.msra.mxu0 %v665
        %681 = vmatpush.bf16.msra.mxu0 %v664
        %682 = vmatpush.bf16.msra.mxu0 %v663
        %683 = vmatpush.bf16.msra.mxu0 %v662
        %684 = vmatpush.bf16.msra.mxu0 %v661
        %685 = vmatmul.bf16.gmra.mxu0 %v601
        %v686 = vpop.f32.mrf.mxu0
        %v687 = vadd.f32 %v627, %v686
        %v688 = vpop.f32.mrf.mxu0
        %v689 = vadd.f32 %v627, %v688
        %690 = vmatmul.bf16.gmra.mxu0 %v602
        %v691 = vpop.f32.mrf.mxu0
        %v692 = vadd.f32 %v627, %v691
        %v693 = vpop.f32.mrf.mxu0
        %v694 = vadd.f32 %v627, %v693
        %695 = vmatmul.bf16.gmra.mxu0 %v603
        %v696 = vpop.f32.mrf.mxu0
        %v697 = vadd.f32 %v627, %v696
        %v698 = vpop.f32.mrf.mxu0
        %v699 = vadd.f32 %v627, %v698
        %700 = vmatmul.bf16.gmra.mxu0 %v604
        %v701 = vpop.f32.mrf.mxu0
        %v702 = vadd.f32 %v627, %v701
        %v703 = vpop.f32.mrf.mxu0
        %v704 = vadd.f32 %v627, %v703
        %705 = vmatmul.bf16.gmra.mxu0 %v605
        %v706 = vpop.f32.mrf.mxu0
        %v707 = vadd.f32 %v627, %v706
        %v708 = vpop.f32.mrf.mxu0
        %v709 = vadd.f32 %v627, %v708
        %710 = vmatmul.bf16.gmra.mxu0 %v606
        %v711 = vpop.f32.mrf.mxu0
        %v712 = vadd.f32 %v627, %v711
        %v713 = vpop.f32.mrf.mxu0
        %v714 = vadd.f32 %v627, %v713
        %715 = vmatmul.bf16.gmra.mxu0 %v607
        %v716 = vpop.f32.mrf.mxu0
        %v717 = vadd.f32 %v627, %v716
        %v718 = vpop.f32.mrf.mxu0
        %v719 = vadd.f32 %v627, %v718
        %720 = vmatmul.bf16.gmra.mxu0 %v608
        %v721 = vpop.f32.mrf.mxu0
        %v722 = vadd.f32 %v627, %v721
        %v723 = vpop.f32.mrf.mxu0
        %v724 = vadd.f32 %v627, %v723
        %725 = vdwg.mxu0
        %v726 = vsub.f32 0.0, %v687
        %v727 = vsub.f32 0.0, %v689
        %v728 = vsub.f32 0.0, %v692
        %v729 = vsub.f32 0.0, %v694
        %v730 = vsub.f32 0.0, %v697
        %v731 = vsub.f32 0.0, %v699
        %v732 = vsub.f32 0.0, %v702
        %v733 = vsub.f32 0.0, %v704
        %v734 = vsub.f32 0.0, %v707
        %v735 = vsub.f32 0.0, %v709
        %v736 = vsub.f32 0.0, %v712
        %v737 = vsub.f32 0.0, %v714
        %v738 = vsub.f32 0.0, %v717
        %v739 = vsub.f32 0.0, %v719
        %v740 = vsub.f32 0.0, %v722
        %v741 = vsub.f32 0.0, %v724
        %v742 = vmul.f32 %v726, 1.442695
        %v743 = vpow.pop %v742
        %v744 = vmul.f32 %v727, 1.442695
        %v745 = vpow.pop %v744
        %v746 = vmul.f32 %v728, 1.442695
        %v747 = vpow.pop %v746
        %v748 = vmul.f32 %v729, 1.442695
        %v749 = vpow.pop %v748
        %v750 = vmul.f32 %v730, 1.442695
        %v751 = vpow.pop %v750
        %v752 = vmul.f32 %v731, 1.442695
        %v753 = vpow.pop %v752
        %v754 = vmul.f32 %v732, 1.442695
        %v755 = vpow.pop %v754
        %v756 = vmul.f32 %v733, 1.442695
        %v757 = vpow.pop %v756
        %v758 = vmul.f32 %v734, 1.442695
        %v759 = vpow.pop %v758
        %v760 = vmul.f32 %v735, 1.442695
        %v761 = vpow.pop %v760
        %v762 = vmul.f32 %v736, 1.442695
        %v763 = vpow.pop %v762
        %v764 = vmul.f32 %v737, 1.442695
        %v765 = vpow.pop %v764
        %v766 = vmul.f32 %v738, 1.442695
        %v767 = vpow.pop %v766
        %v768 = vmul.f32 %v739, 1.442695
        %v769 = vpow.pop %v768
        %v770 = vmul.f32 %v740, 1.442695
        %v771 = vpow.pop %v770
        %v772 = vmul.f32 %v741, 1.442695
        %v773 = vpow.pop %v772
        %v774 = vadd.f32 %v743, 1.0
        %v775 = vadd.f32 %v745, 1.0
        %v776 = vadd.f32 %v747, 1.0
        %v777 = vadd.f32 %v749, 1.0
        %v778 = vadd.f32 %v751, 1.0
        %v779 = vadd.f32 %v753, 1.0
        %v780 = vadd.f32 %v755, 1.0
        %v781 = vadd.f32 %v757, 1.0
        %v782 = vadd.f32 %v759, 1.0
        %v783 = vadd.f32 %v761, 1.0
        %v784 = vadd.f32 %v763, 1.0
        %v785 = vadd.f32 %v765, 1.0
        %v786 = vadd.f32 %v767, 1.0
        %v787 = vadd.f32 %v769, 1.0
        %v788 = vadd.f32 %v771, 1.0
        %v789 = vadd.f32 %v773, 1.0
        %v790 = vrcp.pop %v774
        %v791 = vmul.f32 %v774, %v790
        %v792 = vsub.f32 1.0, %v791
        %v793 = vmul.f32 %v790, %v792
        %v794 = vadd.f32 %v790, %v793
        %vm795 = vweird.f32 %v774
        %vm796 = vweird.f32 %v790
        %vm797 = vmor %vm795, %vm796
        %v798 = vsel %vm797, %v790, %v794
        %v799 = vand.u32 2147483647, %v774
        %vm800 = vcmp.eq.f32.partialorder %v799, 8.507059e+37
        %v801 = vand.u32 %v774, 2147483648
        %v802 = vor.u32 1.1754944e-38, %v801
        %v803 = vsel %vm800, %v802, %v798
        %v804 = vmul.f32 1.0, %v803
        %v805 = vrcp.pop %v775
        %v806 = vmul.f32 %v775, %v805
        %v807 = vsub.f32 1.0, %v806
        %v808 = vmul.f32 %v805, %v807
        %v809 = vadd.f32 %v805, %v808
        %vm810 = vweird.f32 %v775
        %vm811 = vweird.f32 %v805
        %vm812 = vmor %vm810, %vm811
        %v813 = vsel %vm812, %v805, %v809
        %v814 = vand.u32 2147483647, %v775
        %vm815 = vcmp.eq.f32.partialorder %v814, 8.507059e+37
        %v816 = vand.u32 %v775, 2147483648
        %v817 = vor.u32 1.1754944e-38, %v816
        %v818 = vsel %vm815, %v817, %v813
        %v819 = vmul.f32 1.0, %v818
        %v820 = vrcp.pop %v776
        %v821 = vmul.f32 %v776, %v820
        %v822 = vsub.f32 1.0, %v821
        %v823 = vmul.f32 %v820, %v822
        %v824 = vadd.f32 %v820, %v823
        %vm825 = vweird.f32 %v776
        %vm826 = vweird.f32 %v820
        %vm827 = vmor %vm825, %vm826
        %v828 = vsel %vm827, %v820, %v824
        %v829 = vand.u32 2147483647, %v776
        %vm830 = vcmp.eq.f32.partialorder %v829, 8.507059e+37
        %v831 = vand.u32 %v776, 2147483648
        %v832 = vor.u32 1.1754944e-38, %v831
        %v833 = vsel %vm830, %v832, %v828
        %v834 = vmul.f32 1.0, %v833
        %v835 = vrcp.pop %v777
        %v836 = vmul.f32 %v777, %v835
        %v837 = vsub.f32 1.0, %v836
        %v838 = vmul.f32 %v835, %v837
        %v839 = vadd.f32 %v835, %v838
        %vm840 = vweird.f32 %v777
        %vm841 = vweird.f32 %v835
        %vm842 = vmor %vm840, %vm841
        %v843 = vsel %vm842, %v835, %v839
        %v844 = vand.u32 2147483647, %v777
        %vm845 = vcmp.eq.f32.partialorder %v844, 8.507059e+37
        %v846 = vand.u32 %v777, 2147483648
        %v847 = vor.u32 1.1754944e-38, %v846
        %v848 = vsel %vm845, %v847, %v843
        %v849 = vmul.f32 1.0, %v848
        %v850 = vrcp.pop %v778
        %v851 = vmul.f32 %v778, %v850
        %v852 = vsub.f32 1.0, %v851
        %v853 = vmul.f32 %v850, %v852
        %v854 = vadd.f32 %v850, %v853
        %vm855 = vweird.f32 %v778
        %vm856 = vweird.f32 %v850
        %vm857 = vmor %vm855, %vm856
        %v858 = vsel %vm857, %v850, %v854
        %v859 = vand.u32 2147483647, %v778
        %vm860 = vcmp.eq.f32.partialorder %v859, 8.507059e+37
        %v861 = vand.u32 %v778, 2147483648
        %v862 = vor.u32 1.1754944e-38, %v861
        %v863 = vsel %vm860, %v862, %v858
        %v864 = vmul.f32 1.0, %v863
        %v865 = vrcp.pop %v779
        %v866 = vmul.f32 %v779, %v865
        %v867 = vsub.f32 1.0, %v866
        %v868 = vmul.f32 %v865, %v867
        %v869 = vadd.f32 %v865, %v868
        %vm870 = vweird.f32 %v779
        %vm871 = vweird.f32 %v865
        %vm872 = vmor %vm870, %vm871
        %v873 = vsel %vm872, %v865, %v869
        %v874 = vand.u32 2147483647, %v779
        %vm875 = vcmp.eq.f32.partialorder %v874, 8.507059e+37
        %v876 = vand.u32 %v779, 2147483648
        %v877 = vor.u32 1.1754944e-38, %v876
        %v878 = vsel %vm875, %v877, %v873
        %v879 = vmul.f32 1.0, %v878
        %v880 = vrcp.pop %v780
        %v881 = vmul.f32 %v780, %v880
        %v882 = vsub.f32 1.0, %v881
        %v883 = vmul.f32 %v880, %v882
        %v884 = vadd.f32 %v880, %v883
        %vm885 = vweird.f32 %v780
        %vm886 = vweird.f32 %v880
        %vm887 = vmor %vm885, %vm886
        %v888 = vsel %vm887, %v880, %v884
        %v889 = vand.u32 2147483647, %v780
        %vm890 = vcmp.eq.f32.partialorder %v889, 8.507059e+37
        %v891 = vand.u32 %v780, 2147483648
        %v892 = vor.u32 1.1754944e-38, %v891
        %v893 = vsel %vm890, %v892, %v888
        %v894 = vmul.f32 1.0, %v893
        %v895 = vrcp.pop %v781
        %v896 = vmul.f32 %v781, %v895
        %v897 = vsub.f32 1.0, %v896
        %v898 = vmul.f32 %v895, %v897
        %v899 = vadd.f32 %v895, %v898
        %vm900 = vweird.f32 %v781
        %vm901 = vweird.f32 %v895
        %vm902 = vmor %vm900, %vm901
        %v903 = vsel %vm902, %v895, %v899
        %v904 = vand.u32 2147483647, %v781
        %vm905 = vcmp.eq.f32.partialorder %v904, 8.507059e+37
        %v906 = vand.u32 %v781, 2147483648
        %v907 = vor.u32 1.1754944e-38, %v906
        %v908 = vsel %vm905, %v907, %v903
        %v909 = vmul.f32 1.0, %v908
        %v910 = vrcp.pop %v782
        %v911 = vmul.f32 %v782, %v910
        %v912 = vsub.f32 1.0, %v911
        %v913 = vmul.f32 %v910, %v912
        %v914 = vadd.f32 %v910, %v913
        %vm915 = vweird.f32 %v782
        %vm916 = vweird.f32 %v910
        %vm917 = vmor %vm915, %vm916
        %v918 = vsel %vm917, %v910, %v914
        %v919 = vand.u32 2147483647, %v782
        %vm920 = vcmp.eq.f32.partialorder %v919, 8.507059e+37
        %v921 = vand.u32 %v782, 2147483648
        %v922 = vor.u32 1.1754944e-38, %v921
        %v923 = vsel %vm920, %v922, %v918
        %v924 = vmul.f32 1.0, %v923
        %v925 = vrcp.pop %v783
        %v926 = vmul.f32 %v783, %v925
        %v927 = vsub.f32 1.0, %v926
        %v928 = vmul.f32 %v925, %v927
        %v929 = vadd.f32 %v925, %v928
        %vm930 = vweird.f32 %v783
        %vm931 = vweird.f32 %v925
        %vm932 = vmor %vm930, %vm931
        %v933 = vsel %vm932, %v925, %v929
        %v934 = vand.u32 2147483647, %v783
        %vm935 = vcmp.eq.f32.partialorder %v934, 8.507059e+37
        %v936 = vand.u32 %v783, 2147483648
        %v937 = vor.u32 1.1754944e-38, %v936
        %v938 = vsel %vm935, %v937, %v933
        %v939 = vmul.f32 1.0, %v938
        %v940 = vrcp.pop %v784
        %v941 = vmul.f32 %v784, %v940
        %v942 = vsub.f32 1.0, %v941
        %v943 = vmul.f32 %v940, %v942
        %v944 = vadd.f32 %v940, %v943
        %vm945 = vweird.f32 %v784
        %vm946 = vweird.f32 %v940
        %vm947 = vmor %vm945, %vm946
        %v948 = vsel %vm947, %v940, %v944
        %v949 = vand.u32 2147483647, %v784
        %vm950 = vcmp.eq.f32.partialorder %v949, 8.507059e+37
        %v951 = vand.u32 %v784, 2147483648
        %v952 = vor.u32 1.1754944e-38, %v951
        %v953 = vsel %vm950, %v952, %v948
        %v954 = vmul.f32 1.0, %v953
        %v955 = vrcp.pop %v785
        %v956 = vmul.f32 %v785, %v955
        %v957 = vsub.f32 1.0, %v956
        %v958 = vmul.f32 %v955, %v957
        %v959 = vadd.f32 %v955, %v958
        %vm960 = vweird.f32 %v785
        %vm961 = vweird.f32 %v955
        %vm962 = vmor %vm960, %vm961
        %v963 = vsel %vm962, %v955, %v959
        %v964 = vand.u32 2147483647, %v785
        %vm965 = vcmp.eq.f32.partialorder %v964, 8.507059e+37
        %v966 = vand.u32 %v785, 2147483648
        %v967 = vor.u32 1.1754944e-38, %v966
        %v968 = vsel %vm965, %v967, %v963
        %v969 = vmul.f32 1.0, %v968
        %v970 = vrcp.pop %v786
        %v971 = vmul.f32 %v786, %v970
        %v972 = vsub.f32 1.0, %v971
        %v973 = vmul.f32 %v970, %v972
        %v974 = vadd.f32 %v970, %v973
        %vm975 = vweird.f32 %v786
        %vm976 = vweird.f32 %v970
        %vm977 = vmor %vm975, %vm976
        %v978 = vsel %vm977, %v970, %v974
        %v979 = vand.u32 2147483647, %v786
        %vm980 = vcmp.eq.f32.partialorder %v979, 8.507059e+37
        %v981 = vand.u32 %v786, 2147483648
        %v982 = vor.u32 1.1754944e-38, %v981
        %v983 = vsel %vm980, %v982, %v978
        %v984 = vmul.f32 1.0, %v983
        %v985 = vrcp.pop %v787
        %v986 = vmul.f32 %v787, %v985
        %v987 = vsub.f32 1.0, %v986
        %v988 = vmul.f32 %v985, %v987
        %v989 = vadd.f32 %v985, %v988
        %vm990 = vweird.f32 %v787
        %vm991 = vweird.f32 %v985
        %vm992 = vmor %vm990, %vm991
        %v993 = vsel %vm992, %v985, %v989
        %v994 = vand.u32 2147483647, %v787
        %vm995 = vcmp.eq.f32.partialorder %v994, 8.507059e+37
        %v996 = vand.u32 %v787, 2147483648
        %v997 = vor.u32 1.1754944e-38, %v996
        %v998 = vsel %vm995, %v997, %v993
        %v999 = vmul.f32 1.0, %v998
        %v1000 = vrcp.pop %v788
        %v1001 = vmul.f32 %v788, %v1000
        %v1002 = vsub.f32 1.0, %v1001
        %v1003 = vmul.f32 %v1000, %v1002
        %v1004 = vadd.f32 %v1000, %v1003
        %vm1005 = vweird.f32 %v788
        %vm1006 = vweird.f32 %v1000
        %vm1007 = vmor %vm1005, %vm1006
        %v1008 = vsel %vm1007, %v1000, %v1004
        %v1009 = vand.u32 2147483647, %v788
        %vm1010 = vcmp.eq.f32.partialorder %v1009, 8.507059e+37
        %v1011 = vand.u32 %v788, 2147483648
        %v1012 = vor.u32 1.1754944e-38, %v1011
        %v1013 = vsel %vm1010, %v1012, %v1008
        %v1014 = vmul.f32 1.0, %v1013
        %v1015 = vrcp.pop %v789
        %v1016 = vmul.f32 %v789, %v1015
        %v1017 = vsub.f32 1.0, %v1016
        %v1018 = vmul.f32 %v1015, %v1017
        %v1019 = vadd.f32 %v1015, %v1018
        %vm1020 = vweird.f32 %v789
        %vm1021 = vweird.f32 %v1015
        %vm1022 = vmor %vm1020, %vm1021
        %v1023 = vsel %vm1022, %v1015, %v1019
        %v1024 = vand.u32 2147483647, %v789
        %vm1025 = vcmp.eq.f32.partialorder %v1024, 8.507059e+37
        %v1026 = vand.u32 %v789, 2147483648
        %v1027 = vor.u32 1.1754944e-38, %v1026
        %v1028 = vsel %vm1025, %v1027, %v1023
        %v1029 = vmul.f32 1.0, %v1028
        %v1030 = vmul.f32 %v804, %v429
        %v1031 = vmul.f32 %v819, %v431
        %v1032 = vmul.f32 %v834, %v433
        %v1033 = vmul.f32 %v849, %v435
        %v1034 = vmul.f32 %v864, %v437
        %v1035 = vmul.f32 %v879, %v439
        %v1036 = vmul.f32 %v894, %v441
        %v1037 = vmul.f32 %v909, %v443
        %v1038 = vmul.f32 %v924, %v445
        %v1039 = vmul.f32 %v939, %v447
        %v1040 = vmul.f32 %v954, %v449
        %v1041 = vmul.f32 %v969, %v451
        %v1042 = vmul.f32 %v984, %v453
        %v1043 = vmul.f32 %v999, %v455
        %v1044 = vmul.f32 %v1014, %v457
        %v1045 = vmul.f32 %v1029, %v459
        %v1046 = vld [vmem:[#allocation8] sm:$0xff]
        %v1047 = vld [vmem:[#allocation8 + $0x8] sm:$0xff]
        %v1048 = vld [vmem:[#allocation8 + $0x10] sm:$0xff]
        %v1049 = vld [vmem:[#allocation8 + $0x18] sm:$0xff]
        %v1050 = vld [vmem:[#allocation8 + $0x20] sm:$0xff]
        %v1051 = vld [vmem:[#allocation8 + $0x28] sm:$0xff]
        %v1052 = vld [vmem:[#allocation8 + $0x30] sm:$0xff]
        %v1053 = vld [vmem:[#allocation8 + $0x38] sm:$0xff]
        %v1054 = vld [vmem:[#allocation8 + $0x40] sm:$0xff]
        %v1055 = vld [vmem:[#allocation8 + $0x48] sm:$0xff]
        %v1056 = vld [vmem:[#allocation8 + $0x50] sm:$0xff]
        %v1057 = vld [vmem:[#allocation8 + $0x58] sm:$0xff]
        %v1058 = vld [vmem:[#allocation8 + $0x60] sm:$0xff]
        %v1059 = vld [vmem:[#allocation8 + $0x68] sm:$0xff]
        %v1060 = vld [vmem:[#allocation8 + $0x70] sm:$0xff]
        %v1061 = vld [vmem:[#allocation8 + $0x78] sm:$0xff]
        %v1062 = vpack.c.bf16 %v1031, %v1030
        %v1063 = vpack.c.bf16 %v1033, %v1032
        %v1064 = vpack.c.bf16 %v1035, %v1034
        %v1065 = vpack.c.bf16 %v1037, %v1036
        %v1066 = vpack.c.bf16 %v1039, %v1038
        %v1067 = vpack.c.bf16 %v1041, %v1040
        %v1068 = vpack.c.bf16 %v1043, %v1042
        %v1069 = vpack.c.bf16 %v1045, %v1044
        %v1070 = vld [vmem:[#allocation10] sm:$0xff]
        %v1071 = vld [vmem:[#allocation10 + $0x8] sm:$0xff]
        %v1072 = vld [vmem:[#allocation10 + $0x10] sm:$0xff]
        %v1073 = vld [vmem:[#allocation10 + $0x18] sm:$0xff]
        %v1074 = vld [vmem:[#allocation10 + $0x20] sm:$0xff]
        %v1075 = vld [vmem:[#allocation10 + $0x28] sm:$0xff]
        %v1076 = vld [vmem:[#allocation10 + $0x30] sm:$0xff]
        %v1077 = vld [vmem:[#allocation10 + $0x38] sm:$0xff]
        %v1078 = vld [vmem:[#allocation10 + $0x40] sm:$0xff]
        %v1079 = vld [vmem:[#allocation10 + $0x48] sm:$0xff]
        %v1080 = vld [vmem:[#allocation10 + $0x50] sm:$0xff]
        %v1081 = vld [vmem:[#allocation10 + $0x58] sm:$0xff]
        %v1082 = vld [vmem:[#allocation10 + $0x60] sm:$0xff]
        %v1083 = vld [vmem:[#allocation10 + $0x68] sm:$0xff]
        %v1084 = vld [vmem:[#allocation10 + $0x70] sm:$0xff]
        %v1085 = vld [vmem:[#allocation10 + $0x78] sm:$0xff]
        %v1102 = vunpack.c.l.b16 %v1070
        %v1103 = vunpack.c.h.b16 %v1070
        %v1104 = vunpack.c.l.b16 %v1071
        %v1105 = vunpack.c.h.b16 %v1071
        %v1106 = vunpack.c.l.b16 %v1072
        %v1107 = vunpack.c.h.b16 %v1072
        %v1108 = vunpack.c.l.b16 %v1073
        %v1109 = vunpack.c.h.b16 %v1073
        %v1110 = vunpack.c.l.b16 %v1074
        %v1111 = vunpack.c.h.b16 %v1074
        %v1112 = vunpack.c.l.b16 %v1075
        %v1113 = vunpack.c.h.b16 %v1075
        %v1114 = vunpack.c.l.b16 %v1076
        %v1115 = vunpack.c.h.b16 %v1076
        %v1116 = vunpack.c.l.b16 %v1077
        %v1117 = vunpack.c.h.b16 %v1077
        %v1118 = vunpack.c.l.b16 %v1078
        %v1119 = vunpack.c.h.b16 %v1078
        %v1120 = vunpack.c.l.b16 %v1079
        %v1121 = vunpack.c.h.b16 %v1079
        %v1122 = vunpack.c.l.b16 %v1080
        %v1123 = vunpack.c.h.b16 %v1080
        %v1124 = vunpack.c.l.b16 %v1081
        %v1125 = vunpack.c.h.b16 %v1081
        %v1126 = vunpack.c.l.b16 %v1082
        %v1127 = vunpack.c.h.b16 %v1082
        %v1128 = vunpack.c.l.b16 %v1083
        %v1129 = vunpack.c.h.b16 %v1083
        %v1130 = vunpack.c.l.b16 %v1084
        %v1131 = vunpack.c.h.b16 %v1084
        %v1132 = vunpack.c.l.b16 %v1085
        %v1133 = vunpack.c.h.b16 %v1085
        %v1134 = vpack.c.b16 %v1104, %v1102
        %v1135 = vpack.c.b16 %v1105, %v1103
        %v1136 = vpack.c.b16 %v1108, %v1106
        %v1137 = vpack.c.b16 %v1109, %v1107
        %v1138 = vpack.c.b16 %v1112, %v1110
        %v1139 = vpack.c.b16 %v1113, %v1111
        %v1140 = vpack.c.b16 %v1116, %v1114
        %v1141 = vpack.c.b16 %v1117, %v1115
        %v1142 = vpack.c.b16 %v1120, %v1118
        %v1143 = vpack.c.b16 %v1121, %v1119
        %v1144 = vpack.c.b16 %v1124, %v1122
        %v1145 = vpack.c.b16 %v1125, %v1123
        %v1146 = vpack.c.b16 %v1128, %v1126
        %v1147 = vpack.c.b16 %v1129, %v1127
        %v1148 = vpack.c.b16 %v1132, %v1130
        %v1149 = vpack.c.b16 %v1133, %v1131
        %1166 = vmatpush.bf16.msra.mxu0 %v1148
        %1167 = vmatpush.bf16.msra.mxu0 %v1146
        %1168 = vmatpush.bf16.msra.mxu0 %v1144
        %1169 = vmatpush.bf16.msra.mxu0 %v1142
        %1170 = vmatpush.bf16.msra.mxu0 %v1140
        %1171 = vmatpush.bf16.msra.mxu0 %v1138
        %1172 = vmatpush.bf16.msra.mxu0 %v1136
        %1173 = vmatpush.bf16.msra.mxu0 %v1134
        %1174 = vmatmul.bf16.gmra.mxu0 %v1062
        %v1175 = vpop.f32.mrf.mxu0
        %v1176 = vadd.f32 0.0, %v1175
        %v1177 = vpop.f32.mrf.mxu0
        %v1178 = vadd.f32 0.0, %v1177
        %1179 = vmatmul.bf16.gmra.mxu0 %v1063
        %v1180 = vpop.f32.mrf.mxu0
        %v1181 = vadd.f32 0.0, %v1180
        %v1182 = vpop.f32.mrf.mxu0
        %v1183 = vadd.f32 0.0, %v1182
        %1184 = vmatmul.bf16.gmra.mxu0 %v1064
        %v1185 = vpop.f32.mrf.mxu0
        %v1186 = vadd.f32 0.0, %v1185
        %v1187 = vpop.f32.mrf.mxu0
        %v1188 = vadd.f32 0.0, %v1187
        %1189 = vmatmul.bf16.gmra.mxu0 %v1065
        %v1190 = vpop.f32.mrf.mxu0
        %v1191 = vadd.f32 0.0, %v1190
        %v1192 = vpop.f32.mrf.mxu0
        %v1193 = vadd.f32 0.0, %v1192
        %1194 = vmatmul.bf16.gmra.mxu0 %v1066
        %v1195 = vpop.f32.mrf.mxu0
        %v1196 = vadd.f32 0.0, %v1195
        %v1197 = vpop.f32.mrf.mxu0
        %v1198 = vadd.f32 0.0, %v1197
        %1199 = vmatmul.bf16.gmra.mxu0 %v1067
        %v1200 = vpop.f32.mrf.mxu0
        %v1201 = vadd.f32 0.0, %v1200
        %v1202 = vpop.f32.mrf.mxu0
        %v1203 = vadd.f32 0.0, %v1202
        %1204 = vmatmul.bf16.gmra.mxu0 %v1068
        %v1205 = vpop.f32.mrf.mxu0
        %v1206 = vadd.f32 0.0, %v1205
        %v1207 = vpop.f32.mrf.mxu0
        %v1208 = vadd.f32 0.0, %v1207
        %1209 = vmatmul.bf16.gmra.mxu0 %v1069
        %v1210 = vpop.f32.mrf.mxu0
        %v1211 = vadd.f32 0.0, %v1210
        %v1212 = vpop.f32.mrf.mxu0
        %v1213 = vadd.f32 0.0, %v1212
        %1214 = vdwg.mxu0
        %1215 = vmatpush.bf16.msra.mxu0 %v1149
        %1216 = vmatpush.bf16.msra.mxu0 %v1147
        %1217 = vmatpush.bf16.msra.mxu0 %v1145
        %1218 = vmatpush.bf16.msra.mxu0 %v1143
        %1219 = vmatpush.bf16.msra.mxu0 %v1141
        %1220 = vmatpush.bf16.msra.mxu0 %v1139
        %1221 = vmatpush.bf16.msra.mxu0 %v1137
        %1222 = vmatpush.bf16.msra.mxu0 %v1135
        %1223 = vmatmul.bf16.gmra.mxu0 %v1062
        %v1224 = vpop.f32.mrf.mxu0
        %v1225 = vadd.f32 0.0, %v1224
        %v1226 = vpop.f32.mrf.mxu0
        %v1227 = vadd.f32 0.0, %v1226
        %1228 = vmatmul.bf16.gmra.mxu0 %v1063
        %v1229 = vpop.f32.mrf.mxu0
        %v1230 = vadd.f32 0.0, %v1229
        %v1231 = vpop.f32.mrf.mxu0
        %v1232 = vadd.f32 0.0, %v1231
        %1233 = vmatmul.bf16.gmra.mxu0 %v1064
        %v1234 = vpop.f32.mrf.mxu0
        %v1235 = vadd.f32 0.0, %v1234
        %v1236 = vpop.f32.mrf.mxu0
        %v1237 = vadd.f32 0.0, %v1236
        %1238 = vmatmul.bf16.gmra.mxu0 %v1065
        %v1239 = vpop.f32.mrf.mxu0
        %v1240 = vadd.f32 0.0, %v1239
        %v1241 = vpop.f32.mrf.mxu0
        %v1242 = vadd.f32 0.0, %v1241
        %1243 = vmatmul.bf16.gmra.mxu0 %v1066
        %v1244 = vpop.f32.mrf.mxu0
        %v1245 = vadd.f32 0.0, %v1244
        %v1246 = vpop.f32.mrf.mxu0
        %v1247 = vadd.f32 0.0, %v1246
        %1248 = vmatmul.bf16.gmra.mxu0 %v1067
        %v1249 = vpop.f32.mrf.mxu0
        %v1250 = vadd.f32 0.0, %v1249
        %v1251 = vpop.f32.mrf.mxu0
        %v1252 = vadd.f32 0.0, %v1251
        %1253 = vmatmul.bf16.gmra.mxu0 %v1068
        %v1254 = vpop.f32.mrf.mxu0
        %v1255 = vadd.f32 0.0, %v1254
        %v1256 = vpop.f32.mrf.mxu0
        %v1257 = vadd.f32 0.0, %v1256
        %1258 = vmatmul.bf16.gmra.mxu0 %v1069
        %v1259 = vpop.f32.mrf.mxu0
        %v1260 = vadd.f32 0.0, %v1259
        %v1261 = vpop.f32.mrf.mxu0
        %v1262 = vadd.f32 0.0, %v1261
        %1263 = vdwg.mxu0
        %v1280 = vunpack.c.l.b16 %v1046
        %v1281 = vunpack.c.h.b16 %v1046
        %v1282 = vunpack.c.l.b16 %v1047
        %v1283 = vunpack.c.h.b16 %v1047
        %v1284 = vunpack.c.l.b16 %v1048
        %v1285 = vunpack.c.h.b16 %v1048
        %v1286 = vunpack.c.l.b16 %v1049
        %v1287 = vunpack.c.h.b16 %v1049
        %v1288 = vunpack.c.l.b16 %v1050
        %v1289 = vunpack.c.h.b16 %v1050
        %v1290 = vunpack.c.l.b16 %v1051
        %v1291 = vunpack.c.h.b16 %v1051
        %v1292 = vunpack.c.l.b16 %v1052
        %v1293 = vunpack.c.h.b16 %v1052
        %v1294 = vunpack.c.l.b16 %v1053
        %v1295 = vunpack.c.h.b16 %v1053
        %v1296 = vunpack.c.l.b16 %v1054
        %v1297 = vunpack.c.h.b16 %v1054
        %v1298 = vunpack.c.l.b16 %v1055
        %v1299 = vunpack.c.h.b16 %v1055
        %v1300 = vunpack.c.l.b16 %v1056
        %v1301 = vunpack.c.h.b16 %v1056
        %v1302 = vunpack.c.l.b16 %v1057
        %v1303 = vunpack.c.h.b16 %v1057
        %v1304 = vunpack.c.l.b16 %v1058
        %v1305 = vunpack.c.h.b16 %v1058
        %v1306 = vunpack.c.l.b16 %v1059
        %v1307 = vunpack.c.h.b16 %v1059
        %v1308 = vunpack.c.l.b16 %v1060
        %v1309 = vunpack.c.h.b16 %v1060
        %v1310 = vunpack.c.l.b16 %v1061
        %v1311 = vunpack.c.h.b16 %v1061
        %v1312 = vpack.c.b16 %v1282, %v1280
        %v1313 = vpack.c.b16 %v1283, %v1281
        %v1314 = vpack.c.b16 %v1286, %v1284
        %v1315 = vpack.c.b16 %v1287, %v1285
        %v1316 = vpack.c.b16 %v1290, %v1288
        %v1317 = vpack.c.b16 %v1291, %v1289
        %v1318 = vpack.c.b16 %v1294, %v1292
        %v1319 = vpack.c.b16 %v1295, %v1293
        %v1320 = vpack.c.b16 %v1298, %v1296
        %v1321 = vpack.c.b16 %v1299, %v1297
        %v1322 = vpack.c.b16 %v1302, %v1300
        %v1323 = vpack.c.b16 %v1303, %v1301
        %v1324 = vpack.c.b16 %v1306, %v1304
        %v1325 = vpack.c.b16 %v1307, %v1305
        %v1326 = vpack.c.b16 %v1310, %v1308
        %v1327 = vpack.c.b16 %v1311, %v1309
        %1344 = vmatpush.bf16.msra.mxu0 %v1326
        %1345 = vmatpush.bf16.msra.mxu0 %v1324
        %1346 = vmatpush.bf16.msra.mxu0 %v1322
        %1347 = vmatpush.bf16.msra.mxu0 %v1320
        %1348 = vmatpush.bf16.msra.mxu0 %v1318
        %1349 = vmatpush.bf16.msra.mxu0 %v1316
        %1350 = vmatpush.bf16.msra.mxu0 %v1314
        %1351 = vmatpush.bf16.msra.mxu0 %v1312
        %1352 = vmatmul.bf16.gmra.mxu0 %v601
        %v1353 = vpop.f32.mrf.mxu0
        %v1354 = vadd.f32 %v1176, %v1353
        %v1355 = vpop.f32.mrf.mxu0
        %v1356 = vadd.f32 %v1178, %v1355
        %1357 = vmatmul.bf16.gmra.mxu0 %v602
        %v1358 = vpop.f32.mrf.mxu0
        %v1359 = vadd.f32 %v1181, %v1358
        %v1360 = vpop.f32.mrf.mxu0
        %v1361 = vadd.f32 %v1183, %v1360
        %1362 = vmatmul.bf16.gmra.mxu0 %v603
        %v1363 = vpop.f32.mrf.mxu0
        %v1364 = vadd.f32 %v1186, %v1363
        %v1365 = vpop.f32.mrf.mxu0
        %v1366 = vadd.f32 %v1188, %v1365
        %1367 = vmatmul.bf16.gmra.mxu0 %v604
        %v1368 = vpop.f32.mrf.mxu0
        %v1369 = vadd.f32 %v1191, %v1368
        %v1370 = vpop.f32.mrf.mxu0
        %v1371 = vadd.f32 %v1193, %v1370
        %1372 = vmatmul.bf16.gmra.mxu0 %v605
        %v1373 = vpop.f32.mrf.mxu0
        %v1374 = vadd.f32 %v1196, %v1373
        %v1375 = vpop.f32.mrf.mxu0
        %v1376 = vadd.f32 %v1198, %v1375
        %1377 = vmatmul.bf16.gmra.mxu0 %v606
        %v1378 = vpop.f32.mrf.mxu0
        %v1379 = vadd.f32 %v1201, %v1378
        %v1380 = vpop.f32.mrf.mxu0
        %v1381 = vadd.f32 %v1203, %v1380
        %1382 = vmatmul.bf16.gmra.mxu0 %v607
        %v1383 = vpop.f32.mrf.mxu0
        %v1384 = vadd.f32 %v1206, %v1383
        %v1385 = vpop.f32.mrf.mxu0
        %v1386 = vadd.f32 %v1208, %v1385
        %1387 = vmatmul.bf16.gmra.mxu0 %v608
        %v1388 = vpop.f32.mrf.mxu0
        %v1389 = vadd.f32 %v1211, %v1388
        %v1390 = vpop.f32.mrf.mxu0
        %v1391 = vadd.f32 %v1213, %v1390
        %1392 = vdwg.mxu0
        %1393 = vmatpush.bf16.msra.mxu0 %v1327
        %1394 = vmatpush.bf16.msra.mxu0 %v1325
        %1395 = vmatpush.bf16.msra.mxu0 %v1323
        %1396 = vmatpush.bf16.msra.mxu0 %v1321
        %1397 = vmatpush.bf16.msra.mxu0 %v1319
        %1398 = vmatpush.bf16.msra.mxu0 %v1317
        %1399 = vmatpush.bf16.msra.mxu0 %v1315
        %1400 = vmatpush.bf16.msra.mxu0 %v1313
        %1401 = vmatmul.bf16.gmra.mxu0 %v601
        %v1402 = vpop.f32.mrf.mxu0
        %v1403 = vadd.f32 %v1225, %v1402
        %v1404 = vpop.f32.mrf.mxu0
        %v1405 = vadd.f32 %v1227, %v1404
        %1406 = vmatmul.bf16.gmra.mxu0 %v602
        %v1407 = vpop.f32.mrf.mxu0
        %v1408 = vadd.f32 %v1230, %v1407
        %v1409 = vpop.f32.mrf.mxu0
        %v1410 = vadd.f32 %v1232, %v1409
        %1411 = vmatmul.bf16.gmra.mxu0 %v603
        %v1412 = vpop.f32.mrf.mxu0
        %v1413 = vadd.f32 %v1235, %v1412
        %v1414 = vpop.f32.mrf.mxu0
        %v1415 = vadd.f32 %v1237, %v1414
        %1416 = vmatmul.bf16.gmra.mxu0 %v604
        %v1417 = vpop.f32.mrf.mxu0
        %v1418 = vadd.f32 %v1240, %v1417
        %v1419 = vpop.f32.mrf.mxu0
        %v1420 = vadd.f32 %v1242, %v1419
        %1421 = vmatmul.bf16.gmra.mxu0 %v605
        %v1422 = vpop.f32.mrf.mxu0
        %v1423 = vadd.f32 %v1245, %v1422
        %v1424 = vpop.f32.mrf.mxu0
        %v1425 = vadd.f32 %v1247, %v1424
        %1426 = vmatmul.bf16.gmra.mxu0 %v606
        %v1427 = vpop.f32.mrf.mxu0
        %v1428 = vadd.f32 %v1250, %v1427
        %v1429 = vpop.f32.mrf.mxu0
        %v1430 = vadd.f32 %v1252, %v1429
        %1431 = vmatmul.bf16.gmra.mxu0 %v607
        %v1432 = vpop.f32.mrf.mxu0
        %v1433 = vadd.f32 %v1255, %v1432
        %v1434 = vpop.f32.mrf.mxu0
        %v1435 = vadd.f32 %v1257, %v1434
        %1436 = vmatmul.bf16.gmra.mxu0 %v608
        %v1437 = vpop.f32.mrf.mxu0
        %v1438 = vadd.f32 %v1260, %v1437
        %v1439 = vpop.f32.mrf.mxu0
        %v1440 = vadd.f32 %v1262, %v1439
        %1441 = vdwg.mxu0
        %v1442 = vld [vmem:[%s7 + $0x2] sm:$0x3]
        %v1444 = vperm.slane %v1442, 0
        %v1445 = vperm.slane %v1442, 1
        %v1448 = vadd.f32 %v1354, %v1444
        %v1449 = vadd.f32 %v1403, %v1445
        %v1450 = vadd.f32 %v1356, %v1444
        %v1451 = vadd.f32 %v1405, %v1445
        %v1452 = vadd.f32 %v1359, %v1444
        %v1453 = vadd.f32 %v1408, %v1445
        %v1454 = vadd.f32 %v1361, %v1444
        %v1455 = vadd.f32 %v1410, %v1445
        %v1456 = vadd.f32 %v1364, %v1444
        %v1457 = vadd.f32 %v1413, %v1445
        %v1458 = vadd.f32 %v1366, %v1444
        %v1459 = vadd.f32 %v1415, %v1445
        %v1460 = vadd.f32 %v1369, %v1444
        %v1461 = vadd.f32 %v1418, %v1445
        %v1462 = vadd.f32 %v1371, %v1444
        %v1463 = vadd.f32 %v1420, %v1445
        %v1464 = vadd.f32 %v1374, %v1444
        %v1465 = vadd.f32 %v1423, %v1445
        %v1466 = vadd.f32 %v1376, %v1444
        %v1467 = vadd.f32 %v1425, %v1445
        %v1468 = vadd.f32 %v1379, %v1444
        %v1469 = vadd.f32 %v1428, %v1445
        %v1470 = vadd.f32 %v1381, %v1444
        %v1471 = vadd.f32 %v1430, %v1445
        %v1472 = vadd.f32 %v1384, %v1444
        %v1473 = vadd.f32 %v1433, %v1445
        %v1474 = vadd.f32 %v1386, %v1444
        %v1475 = vadd.f32 %v1435, %v1445
        %v1476 = vadd.f32 %v1389, %v1444
        %v1477 = vadd.f32 %v1438, %v1445
        %v1478 = vadd.f32 %v1391, %v1444
        %v1479 = vadd.f32 %v1440, %v1445
        %v1480 = vmax.f32 %v1448, 0.0
        %v1481 = vmax.f32 %v1449, 0.0
        %v1482 = vmax.f32 %v1450, 0.0
        %v1483 = vmax.f32 %v1451, 0.0
        %v1484 = vmax.f32 %v1452, 0.0
        %v1485 = vmax.f32 %v1453, 0.0
        %v1486 = vmax.f32 %v1454, 0.0
        %v1487 = vmax.f32 %v1455, 0.0
        %v1488 = vmax.f32 %v1456, 0.0
        %v1489 = vmax.f32 %v1457, 0.0
        %v1490 = vmax.f32 %v1458, 0.0
        %v1491 = vmax.f32 %v1459, 0.0
        %v1492 = vmax.f32 %v1460, 0.0
        %v1493 = vmax.f32 %v1461, 0.0
        %v1494 = vmax.f32 %v1462, 0.0
        %v1495 = vmax.f32 %v1463, 0.0
        %v1496 = vmax.f32 %v1464, 0.0
        %v1497 = vmax.f32 %v1465, 0.0
        %v1498 = vmax.f32 %v1466, 0.0
        %v1499 = vmax.f32 %v1467, 0.0
        %v1500 = vmax.f32 %v1468, 0.0
        %v1501 = vmax.f32 %v1469, 0.0
        %v1502 = vmax.f32 %v1470, 0.0
        %v1503 = vmax.f32 %v1471, 0.0
        %v1504 = vmax.f32 %v1472, 0.0
        %v1505 = vmax.f32 %v1473, 0.0
        %v1506 = vmax.f32 %v1474, 0.0
        %v1507 = vmax.f32 %v1475, 0.0
        %v1508 = vmax.f32 %v1476, 0.0
        %v1509 = vmax.f32 %v1477, 0.0
        %v1510 = vmax.f32 %v1478, 0.0
        %v1511 = vmax.f32 %v1479, 0.0
        %v1512 = vpack.c.bf16 %v1482, %v1480
        %v1513 = vpack.c.bf16 %v1483, %v1481
        %v1514 = vpack.c.bf16 %v1486, %v1484
        %v1515 = vpack.c.bf16 %v1487, %v1485
        %v1516 = vpack.c.bf16 %v1490, %v1488
        %v1517 = vpack.c.bf16 %v1491, %v1489
        %v1518 = vpack.c.bf16 %v1494, %v1492
        %v1519 = vpack.c.bf16 %v1495, %v1493
        %v1520 = vpack.c.bf16 %v1498, %v1496
        %v1521 = vpack.c.bf16 %v1499, %v1497
        %v1522 = vpack.c.bf16 %v1502, %v1500
        %v1523 = vpack.c.bf16 %v1503, %v1501
        %v1524 = vpack.c.bf16 %v1506, %v1504
        %v1525 = vpack.c.bf16 %v1507, %v1505
        %v1526 = vpack.c.bf16 %v1510, %v1508
        %v1527 = vpack.c.bf16 %v1511, %v1509
        %v1528 = vld [vmem:[#allocation11] sm:$0xf]
        %v1529 = vld [vmem:[#allocation11 + $0x4] sm:$0xf]
        %v1530 = vld [vmem:[#allocation11 + $0x8] sm:$0xf]
        %v1531 = vld [vmem:[#allocation11 + $0xc] sm:$0xf]
        %v1532 = vld [vmem:[#allocation11 + $0x10] sm:$0xf]
        %v1533 = vld [vmem:[#allocation11 + $0x14] sm:$0xf]
        %v1534 = vld [vmem:[#allocation11 + $0x18] sm:$0xf]
        %v1535 = vld [vmem:[#allocation11 + $0x1c] sm:$0xf]
        %v1536 = vld [vmem:[#allocation11 + $0x20] sm:$0xf]
        %v1537 = vld [vmem:[#allocation11 + $0x24] sm:$0xf]
        %v1538 = vld [vmem:[#allocation11 + $0x28] sm:$0xf]
        %v1539 = vld [vmem:[#allocation11 + $0x2c] sm:$0xf]
        %v1540 = vld [vmem:[#allocation11 + $0x30] sm:$0xf]
        %v1541 = vld [vmem:[#allocation11 + $0x34] sm:$0xf]
        %v1542 = vld [vmem:[#allocation11 + $0x38] sm:$0xf]
        %v1543 = vld [vmem:[#allocation11 + $0x3c] sm:$0xf]
        %v1544 = vld [vmem:[#allocation11 + $0x40] sm:$0xf]
        %v1545 = vld [vmem:[#allocation11 + $0x44] sm:$0xf]
        %v1546 = vld [vmem:[#allocation11 + $0x48] sm:$0xf]
        %v1547 = vld [vmem:[#allocation11 + $0x4c] sm:$0xf]
        %v1548 = vld [vmem:[#allocation11 + $0x50] sm:$0xf]
        %v1549 = vld [vmem:[#allocation11 + $0x54] sm:$0xf]
        %v1550 = vld [vmem:[#allocation11 + $0x58] sm:$0xf]
        %v1551 = vld [vmem:[#allocation11 + $0x5c] sm:$0xf]
        %v1552 = vld [vmem:[#allocation11 + $0x60] sm:$0xf]
        %v1553 = vld [vmem:[#allocation11 + $0x64] sm:$0xf]
        %v1554 = vld [vmem:[#allocation11 + $0x68] sm:$0xf]
        %v1555 = vld [vmem:[#allocation11 + $0x6c] sm:$0xf]
        %v1556 = vld [vmem:[#allocation11 + $0x70] sm:$0xf]
        %v1557 = vld [vmem:[#allocation11 + $0x74] sm:$0xf]
        %v1558 = vld [vmem:[#allocation11 + $0x78] sm:$0xf]
        %v1559 = vld [vmem:[#allocation11 + $0x7c] sm:$0xf]
        %v1560 = vld [vmem:[%s7 + $0x4] sm:$0x1]
        %v1562 = vperm.slane %v1560, 0
        %v1596 = vunpack.c.l.b16 %v1528
        %v1597 = vunpack.c.l.b16 %v1529
        %v1598 = vunpack.c.l.b16 %v1530
        %v1599 = vunpack.c.l.b16 %v1531
        %v1600 = vunpack.c.l.b16 %v1532
        %v1601 = vunpack.c.l.b16 %v1533
        %v1602 = vunpack.c.l.b16 %v1534
        %v1603 = vunpack.c.l.b16 %v1535
        %v1604 = vunpack.c.l.b16 %v1536
        %v1605 = vunpack.c.l.b16 %v1537
        %v1606 = vunpack.c.l.b16 %v1538
        %v1607 = vunpack.c.l.b16 %v1539
        %v1608 = vunpack.c.l.b16 %v1540
        %v1609 = vunpack.c.l.b16 %v1541
        %v1610 = vunpack.c.l.b16 %v1542
        %v1611 = vunpack.c.l.b16 %v1543
        %v1612 = vunpack.c.l.b16 %v1544
        %v1613 = vunpack.c.l.b16 %v1545
        %v1614 = vunpack.c.l.b16 %v1546
        %v1615 = vunpack.c.l.b16 %v1547
        %v1616 = vunpack.c.l.b16 %v1548
        %v1617 = vunpack.c.l.b16 %v1549
        %v1618 = vunpack.c.l.b16 %v1550
        %v1619 = vunpack.c.l.b16 %v1551
        %v1620 = vunpack.c.l.b16 %v1552
        %v1621 = vunpack.c.l.b16 %v1553
        %v1622 = vunpack.c.l.b16 %v1554
        %v1623 = vunpack.c.l.b16 %v1555
        %v1624 = vunpack.c.l.b16 %v1556
        %v1625 = vunpack.c.l.b16 %v1557
        %v1626 = vunpack.c.l.b16 %v1558
        %v1627 = vunpack.c.l.b16 %v1559
        %v1628 = vpack.c.b16 %v1597, %v1596
        %v1629 = vpack.c.b16 %v1599, %v1598
        %v1630 = vpack.c.b16 %v1601, %v1600
        %v1631 = vpack.c.b16 %v1603, %v1602
        %v1632 = vpack.c.b16 %v1605, %v1604
        %v1633 = vpack.c.b16 %v1607, %v1606
        %v1634 = vpack.c.b16 %v1609, %v1608
        %v1635 = vpack.c.b16 %v1611, %v1610
        %v1636 = vpack.c.b16 %v1613, %v1612
        %v1637 = vpack.c.b16 %v1615, %v1614
        %v1638 = vpack.c.b16 %v1617, %v1616
        %v1639 = vpack.c.b16 %v1619, %v1618
        %v1640 = vpack.c.b16 %v1621, %v1620
        %v1641 = vpack.c.b16 %v1623, %v1622
        %v1642 = vpack.c.b16 %v1625, %v1624
        %v1643 = vpack.c.b16 %v1627, %v1626
        %1660 = vmatpush.bf16.msra.mxu0 %v1635
        %1661 = vmatpush.bf16.msra.mxu0 %v1634
        %1662 = vmatpush.bf16.msra.mxu0 %v1633
        %1663 = vmatpush.bf16.msra.mxu0 %v1632
        %1664 = vmatpush.bf16.msra.mxu0 %v1631
        %1665 = vmatpush.bf16.msra.mxu0 %v1630
        %1666 = vmatpush.bf16.msra.mxu0 %v1629
        %1667 = vmatpush.bf16.msra.mxu0 %v1628
        %1668 = vmatmul.bf16.gmra.mxu0 %v1512
        %v1669 = vpop.f32.mrf.mxu0
        %v1670 = vadd.f32 %v1562, %v1669
        %v1671 = vpop.f32.mrf.mxu0
        %v1672 = vadd.f32 %v1562, %v1671
        %1673 = vmatmul.bf16.gmra.mxu0 %v1514
        %v1674 = vpop.f32.mrf.mxu0
        %v1675 = vadd.f32 %v1562, %v1674
        %v1676 = vpop.f32.mrf.mxu0
        %v1677 = vadd.f32 %v1562, %v1676
        %1678 = vmatmul.bf16.gmra.mxu0 %v1516
        %v1679 = vpop.f32.mrf.mxu0
        %v1680 = vadd.f32 %v1562, %v1679
        %v1681 = vpop.f32.mrf.mxu0
        %v1682 = vadd.f32 %v1562, %v1681
        %1683 = vmatmul.bf16.gmra.mxu0 %v1518
        %v1684 = vpop.f32.mrf.mxu0
        %v1685 = vadd.f32 %v1562, %v1684
        %v1686 = vpop.f32.mrf.mxu0
        %v1687 = vadd.f32 %v1562, %v1686
        %1688 = vmatmul.bf16.gmra.mxu0 %v1520
        %v1689 = vpop.f32.mrf.mxu0
        %v1690 = vadd.f32 %v1562, %v1689
        %v1691 = vpop.f32.mrf.mxu0
        %v1692 = vadd.f32 %v1562, %v1691
        %1693 = vmatmul.bf16.gmra.mxu0 %v1522
        %v1694 = vpop.f32.mrf.mxu0
        %v1695 = vadd.f32 %v1562, %v1694
        %v1696 = vpop.f32.mrf.mxu0
        %v1697 = vadd.f32 %v1562, %v1696
        %1698 = vmatmul.bf16.gmra.mxu0 %v1524
        %v1699 = vpop.f32.mrf.mxu0
        %v1700 = vadd.f32 %v1562, %v1699
        %v1701 = vpop.f32.mrf.mxu0
        %v1702 = vadd.f32 %v1562, %v1701
        %1703 = vmatmul.bf16.gmra.mxu0 %v1526
        %v1704 = vpop.f32.mrf.mxu0
        %v1705 = vadd.f32 %v1562, %v1704
        %v1706 = vpop.f32.mrf.mxu0
        %v1707 = vadd.f32 %v1562, %v1706
        %1708 = vdwg.mxu0
        %1709 = vmatpush.bf16.msra.mxu0 %v1643
        %1710 = vmatpush.bf16.msra.mxu0 %v1642
        %1711 = vmatpush.bf16.msra.mxu0 %v1641
        %1712 = vmatpush.bf16.msra.mxu0 %v1640
        %1713 = vmatpush.bf16.msra.mxu0 %v1639
        %1714 = vmatpush.bf16.msra.mxu0 %v1638
        %1715 = vmatpush.bf16.msra.mxu0 %v1637
        %1716 = vmatpush.bf16.msra.mxu0 %v1636
        %1717 = vmatmul.bf16.gmra.mxu0 %v1513
        %v1718 = vpop.f32.mrf.mxu0
        %v1719 = vadd.f32 %v1670, %v1718
        %v1720 = vpop.f32.mrf.mxu0
        %v1721 = vadd.f32 %v1672, %v1720
        %1722 = vmatmul.bf16.gmra.mxu0 %v1515
        %v1723 = vpop.f32.mrf.mxu0
        %v1724 = vadd.f32 %v1675, %v1723
        %v1725 = vpop.f32.mrf.mxu0
        %v1726 = vadd.f32 %v1677, %v1725
        %1727 = vmatmul.bf16.gmra.mxu0 %v1517
        %v1728 = vpop.f32.mrf.mxu0
        %v1729 = vadd.f32 %v1680, %v1728
        %v1730 = vpop.f32.mrf.mxu0
        %v1731 = vadd.f32 %v1682, %v1730
        %1732 = vmatmul.bf16.gmra.mxu0 %v1519
        %v1733 = vpop.f32.mrf.mxu0
        %v1734 = vadd.f32 %v1685, %v1733
        %v1735 = vpop.f32.mrf.mxu0
        %v1736 = vadd.f32 %v1687, %v1735
        %1737 = vmatmul.bf16.gmra.mxu0 %v1521
        %v1738 = vpop.f32.mrf.mxu0
        %v1739 = vadd.f32 %v1690, %v1738
        %v1740 = vpop.f32.mrf.mxu0
        %v1741 = vadd.f32 %v1692, %v1740
        %1742 = vmatmul.bf16.gmra.mxu0 %v1523
        %v1743 = vpop.f32.mrf.mxu0
        %v1744 = vadd.f32 %v1695, %v1743
        %v1745 = vpop.f32.mrf.mxu0
        %v1746 = vadd.f32 %v1697, %v1745
        %1747 = vmatmul.bf16.gmra.mxu0 %v1525
        %v1748 = vpop.f32.mrf.mxu0
        %v1749 = vadd.f32 %v1700, %v1748
        %v1750 = vpop.f32.mrf.mxu0
        %v1751 = vadd.f32 %v1702, %v1750
        %1752 = vmatmul.bf16.gmra.mxu0 %v1527
        %v1753 = vpop.f32.mrf.mxu0
        %v1754 = vadd.f32 %v1705, %v1753
        %v1755 = vpop.f32.mrf.mxu0
        %v1756 = vadd.f32 %v1707, %v1755
        %1757 = vdwg.mxu0
        %v1758 = vmax.f32 %v1719, 0.0
        %v1759 = vmax.f32 %v1721, 0.0
        %v1760 = vmax.f32 %v1724, 0.0
        %v1761 = vmax.f32 %v1726, 0.0
        %v1762 = vmax.f32 %v1729, 0.0
        %v1763 = vmax.f32 %v1731, 0.0
        %v1764 = vmax.f32 %v1734, 0.0
        %v1765 = vmax.f32 %v1736, 0.0
        %v1766 = vmax.f32 %v1739, 0.0
        %v1767 = vmax.f32 %v1741, 0.0
        %v1768 = vmax.f32 %v1744, 0.0
        %v1769 = vmax.f32 %v1746, 0.0
        %v1770 = vmax.f32 %v1749, 0.0
        %v1771 = vmax.f32 %v1751, 0.0
        %v1772 = vmax.f32 %v1754, 0.0
        %v1773 = vmax.f32 %v1756, 0.0
        %v1774 = vpack.c.bf16 %v1759, %v1758
        %v1775 = vpack.c.bf16 %v1761, %v1760
        %v1776 = vpack.c.bf16 %v1763, %v1762
        %v1777 = vpack.c.bf16 %v1765, %v1764
        %v1778 = vpack.c.bf16 %v1767, %v1766
        %v1779 = vpack.c.bf16 %v1769, %v1768
        %v1780 = vpack.c.bf16 %v1771, %v1770
        %v1781 = vpack.c.bf16 %v1773, %v1772
        %v1782 = vld [vmem:[#allocation13] sm:$0xf]
        %v1783 = vld [vmem:[#allocation13 + $0x4] sm:$0xf]
        %v1784 = vld [vmem:[#allocation13 + $0x8] sm:$0xf]
        %v1785 = vld [vmem:[#allocation13 + $0xc] sm:$0xf]
        %v1786 = vld [vmem:[#allocation13 + $0x10] sm:$0xf]
        %v1787 = vld [vmem:[#allocation13 + $0x14] sm:$0xf]
        %v1788 = vld [vmem:[#allocation13 + $0x18] sm:$0xf]
        %v1789 = vld [vmem:[#allocation13 + $0x1c] sm:$0xf]
        %v1790 = vld [vmem:[#allocation13 + $0x20] sm:$0xf]
        %v1791 = vld [vmem:[#allocation13 + $0x24] sm:$0xf]
        %v1792 = vld [vmem:[#allocation13 + $0x28] sm:$0xf]
        %v1793 = vld [vmem:[#allocation13 + $0x2c] sm:$0xf]
        %v1794 = vld [vmem:[#allocation13 + $0x30] sm:$0xf]
        %v1795 = vld [vmem:[#allocation13 + $0x34] sm:$0xf]
        %v1796 = vld [vmem:[#allocation13 + $0x38] sm:$0xf]
        %v1797 = vld [vmem:[#allocation13 + $0x3c] sm:$0xf]
        %v1798 = vld [vmem:[%s7 + $0x5] sm:$0x1]
        %v1800 = vperm.slane %v1798, 0
        %v1818 = vunpack.c.l.b16 %v1782
        %v1819 = vunpack.c.l.b16 %v1783
        %v1820 = vunpack.c.l.b16 %v1784
        %v1821 = vunpack.c.l.b16 %v1785
        %v1822 = vunpack.c.l.b16 %v1786
        %v1823 = vunpack.c.l.b16 %v1787
        %v1824 = vunpack.c.l.b16 %v1788
        %v1825 = vunpack.c.l.b16 %v1789
        %v1826 = vunpack.c.l.b16 %v1790
        %v1827 = vunpack.c.l.b16 %v1791
        %v1828 = vunpack.c.l.b16 %v1792
        %v1829 = vunpack.c.l.b16 %v1793
        %v1830 = vunpack.c.l.b16 %v1794
        %v1831 = vunpack.c.l.b16 %v1795
        %v1832 = vunpack.c.l.b16 %v1796
        %v1833 = vunpack.c.l.b16 %v1797
        %v1834 = vpack.c.b16 %v1819, %v1818
        %v1835 = vpack.c.b16 %v1821, %v1820
        %v1836 = vpack.c.b16 %v1823, %v1822
        %v1837 = vpack.c.b16 %v1825, %v1824
        %v1838 = vpack.c.b16 %v1827, %v1826
        %v1839 = vpack.c.b16 %v1829, %v1828
        %v1840 = vpack.c.b16 %v1831, %v1830
        %v1841 = vpack.c.b16 %v1833, %v1832
        %1850 = vmatpush.bf16.msra.mxu0 %v1841
        %1851 = vmatpush.bf16.msra.mxu0 %v1840
        %1852 = vmatpush.bf16.msra.mxu0 %v1839
        %1853 = vmatpush.bf16.msra.mxu0 %v1838
        %1854 = vmatpush.bf16.msra.mxu0 %v1837
        %1855 = vmatpush.bf16.msra.mxu0 %v1836
        %1856 = vmatpush.bf16.msra.mxu0 %v1835
        %1857 = vmatpush.bf16.msra.mxu0 %v1834
        %1858 = vmatmul.bf16.gmra.mxu0 %v1774
        %v1859 = vpop.f32.mrf.mxu0
        %v1860 = vadd.f32 %v1800, %v1859
        %v1861 = vpop.f32.mrf.mxu0
        %v1862 = vadd.f32 %v1800, %v1861
        %1863 = vmatmul.bf16.gmra.mxu0 %v1775
        %v1864 = vpop.f32.mrf.mxu0
        %v1865 = vadd.f32 %v1800, %v1864
        %v1866 = vpop.f32.mrf.mxu0
        %v1867 = vadd.f32 %v1800, %v1866
        %1868 = vmatmul.bf16.gmra.mxu0 %v1776
        %v1869 = vpop.f32.mrf.mxu0
        %v1870 = vadd.f32 %v1800, %v1869
        %v1871 = vpop.f32.mrf.mxu0
        %v1872 = vadd.f32 %v1800, %v1871
        %1873 = vmatmul.bf16.gmra.mxu0 %v1777
        %v1874 = vpop.f32.mrf.mxu0
        %v1875 = vadd.f32 %v1800, %v1874
        %v1876 = vpop.f32.mrf.mxu0
        %v1877 = vadd.f32 %v1800, %v1876
        %1878 = vmatmul.bf16.gmra.mxu0 %v1778
        %v1879 = vpop.f32.mrf.mxu0
        %v1880 = vadd.f32 %v1800, %v1879
        %v1881 = vpop.f32.mrf.mxu0
        %v1882 = vadd.f32 %v1800, %v1881
        %1883 = vmatmul.bf16.gmra.mxu0 %v1779
        %v1884 = vpop.f32.mrf.mxu0
        %v1885 = vadd.f32 %v1800, %v1884
        %v1886 = vpop.f32.mrf.mxu0
        %v1887 = vadd.f32 %v1800, %v1886
        %1888 = vmatmul.bf16.gmra.mxu0 %v1780
        %v1889 = vpop.f32.mrf.mxu0
        %v1890 = vadd.f32 %v1800, %v1889
        %v1891 = vpop.f32.mrf.mxu0
        %v1892 = vadd.f32 %v1800, %v1891
        %1893 = vmatmul.bf16.gmra.mxu0 %v1781
        %v1894 = vpop.f32.mrf.mxu0
        %v1895 = vadd.f32 %v1800, %v1894
        %v1896 = vpop.f32.mrf.mxu0
        %v1897 = vadd.f32 %v1800, %v1896
        %1898 = vdwg.mxu0
        %1899 = vst [vmem:[%s425] sm:$0xff] %v1860
        %1900 = vst [vmem:[%s425 + $0x8] sm:$0xff] %v1862
        %1901 = vst [vmem:[%s425 + $0x10] sm:$0xff] %v1865
        %1902 = vst [vmem:[%s425 + $0x18] sm:$0xff] %v1867
        %1903 = vst [vmem:[%s425 + $0x20] sm:$0xff] %v1870
        %1904 = vst [vmem:[%s425 + $0x28] sm:$0xff] %v1872
        %1905 = vst [vmem:[%s425 + $0x30] sm:$0xff] %v1875
        %1906 = vst [vmem:[%s425 + $0x38] sm:$0xff] %v1877
        %1907 = vst [vmem:[%s425 + $0x40] sm:$0xff] %v1880
        %1908 = vst [vmem:[%s425 + $0x48] sm:$0xff] %v1882
        %1909 = vst [vmem:[%s425 + $0x50] sm:$0xff] %v1885
        %1910 = vst [vmem:[%s425 + $0x58] sm:$0xff] %v1887
        %1911 = vst [vmem:[%s425 + $0x60] sm:$0xff] %v1890
        %1912 = vst [vmem:[%s425 + $0x68] sm:$0xff] %v1892
        %1913 = vst [vmem:[%s425 + $0x70] sm:$0xff] %v1895
        %1914 = vst [vmem:[%s425 + $0x78] sm:$0xff] %v1897
        %s1915 = sand.u32 %s209, 1
        %s1916 = scalar_lea.sflag [#allocation4], %s1915
        %s1917 = sand.u32 %s209, 1
        %s1918 = smul.addr %s1917, 128
        %s1919 = scalar_lea.vmem [#allocation14], %s1918
        // Predicated region
        $region81: #{tpu_custom_call.1} parent=51 // pred_check
          %p1920 = pneg %p219
        $region82: #{tpu_custom_call.1} parent=51 // pred_check_branch
          %1922 = sbr.rel (%p1920) target = $region84
        $region83: #{tpu_custom_call.1} parent=51 // pred_region
          %s1923 = smul.u32 16, %s28
          %1925 = vsyncadd %s1916, 0
          %s1926 = smul.addr %s1923, 8
          %s1927 = scalar_lea.hbm %s8, %s1926
          %s1928 = sshll.u32 %s1919, 4
          %s1929 = int_to_ptr.vmem [resolvable:$true] %s1928
          %s1930 = sshll.u32 %s1927, 4
          %s1931 = int_to_ptr.hbm [resolvable:$true] %s1930
          %1936 = dma.vmem_to_hbm [thread:$0]  %s1929, 2048, %s1931, %s1916, 128, 128, 8
        $region84: #{tpu_custom_call.1} parent=51 // pred_fallthru
          _
      $region52: #{tpu_custom_call.1} parent=5 // pred_fallthru
        _
      %p1937 = scmp.le.s32.totalorder 2, %s23
      // Predicated region
      $region85: #{tpu_custom_call.1} parent=5 // pred_check
        %p1938 = pneg %p1937
      $region86: #{tpu_custom_call.1} parent=5 // pred_check_branch
        %1940 = sbr.rel (%p1938) target = $region88
      $region87: #{tpu_custom_call.1} parent=5 // pred_region
        %s1941 = ssub.s32 %s23, 2
        // Predicated region
        $region89: #{tpu_custom_call.1} parent=87 // pred_check
          %p1942 = pneg %p225
        $region90: #{tpu_custom_call.1} parent=87 // pred_check_branch
          %1944 = sbr.rel (%p1942) target = $region92
        $region91: #{tpu_custom_call.1} parent=87 // pred_region
          %s1945 = sand.u32 %s210, 1
          %s1946 = scalar_lea.sflag [#allocation4], %s1945
          %s1947 = sand.u32 %s210, 1
          %s1948 = smul.addr %s1947, 128
          %s1949 = scalar_lea.vmem [#allocation14], %s1948
          %1951 = dma.done %s1946, 2048
        $region92: #{tpu_custom_call.1} parent=87 // pred_fallthru
          _
      $region88: #{tpu_custom_call.1} parent=5 // pred_fallthru
        _
    $region6: #{tpu_custom_call.1} parent=1 // loop_footer
      %s27 = sadd.s32 1, %s23
    $region7: #{tpu_custom_call.1} parent=1 // loop_footer_branch
      %22 = sbr.rel target = $region3
    $region8: #{tpu_custom_call.1} parent=1 // loop_exit
      _
    %1952 = vsyncpa [#allocation3], 1
    %s1953 = scalar_lea.sflag [#allocation3], 1
    %1954 = vsyncpa %s1953, 1
    %1955 = vsyncpa [#allocation6], 1
    %1956 = vsyncpa [#allocation9], 1
    %1957 = vsyncpa [#allocation12], 1
    %1958 = vsyncpa [#allocation4], 1
    %s1959 = scalar_lea.sflag [#allocation4], 1
    %1960 = vsyncpa %s1959, 1

</llo_original>
